<compile_context>
chip_gen: v6e
topology: v6e:2x2x1
jax: 0.10.0
libtpu: 0.0.40
codegen_flags: <defaults>
</compile_context>

<pallas_src>
import numpy as np
import jax
import jax.numpy as jnp
from jax.experimental import pallas as pl
from jax.experimental.pallas import tpu as pltpu

SCALE = np.float32(np.sqrt(0.5))
K = 3          # kernel_size (must be odd)
N_LAYERS = 2   # n_layers


# ------------------------------ Pallas kernel -------------------------------

def _encoder_kernel(emb_ref, w_e2h_ref, b_e2h_ref,
                    wa_ref, wg_ref, ba_ref, bg_ref,
                    w_h2e_ref, b_h2e_ref,
                    conved_ref, combined_ref):
    """Fused encoder forward for one batch element.

    emb_ref   : [1, S, E] f32            token + position embedding
    w_e2h_ref : [E, H]    bf16           emb2hid weight (pre-transposed)
    b_e2h_ref : [1, H]    f32
    wa_ref    : [N_LAYERS*K, H, H] bf16  conv taps, GLU "value" half
    wg_ref    : [N_LAYERS*K, H, H] bf16  conv taps, GLU "gate"  half
    ba_ref    : [N_LAYERS, 1, H]   f32
    bg_ref    : [N_LAYERS, 1, H]   f32
    w_h2e_ref : [H, E]    bf16           hid2emb weight (pre-transposed)
    b_h2e_ref : [1, E]    f32
    conved_ref, combined_ref : [1, S, E] f32 outputs
    """
    emb = emb_ref[0]                                         # [S, E] f32
    S = emb.shape[0]
    H = w_e2h_ref.shape[1]

    # emb2hid: x = emb @ W + b   (bf16 MXU operands, f32 accumulation)
    x = jnp.dot(emb.astype(jnp.bfloat16), w_e2h_ref[...],
                preferred_element_type=jnp.float32) + b_e2h_ref[...]   # [S, H]

    zero_row = jnp.zeros((1, H), jnp.float32)
    for layer in range(N_LAYERS):
        # K=3 shifted views of x (zero padding at sequence ends), built in VMEM.
        x_prev = jnp.concatenate([zero_row, x[:S - 1, :]], axis=0)  # row t = x[t-1]
        x_next = jnp.concatenate([x[1:, :], zero_row], axis=0)      # row t = x[t+1]
        taps = (x_prev.astype(jnp.bfloat16),
                x.astype(jnp.bfloat16),
                x_next.astype(jnp.bfloat16))

        a = ba_ref[layer]                                    # [1, H], broadcasts
        g = bg_ref[layer]
        for k in range(K):
            w_idx = layer * K + k
            a = a + jnp.dot(taps[k], wa_ref[w_idx],
                            preferred_element_type=jnp.float32)
            g = g + jnp.dot(taps[k], wg_ref[w_idx],
                            preferred_element_type=jnp.float32)

        # GLU + residual + scale, fused epilogue in f32 (sigmoid -> EUP slot).
        x = (a * jax.nn.sigmoid(g) + x) * SCALE              # [S, H]

    # hid2emb + combined written once.
    conved = jnp.dot(x.astype(jnp.bfloat16), w_h2e_ref[...],
                     preferred_element_type=jnp.float32) + b_h2e_ref[...]  # [S, E]
    conved_ref[0] = conved
    combined_ref[0] = (conved + emb) * SCALE


# ------------------------------ host-side glue -------------------------------

def _pack_params(p):
    """Split GLU halves, reorder conv taps to matmul layout, cast to bf16."""
    H = p["emb2hid_w"].shape[1]
    wa, wg, ba, bg = [], [], [], []
    for i in range(N_LAYERS):
        w = p[f"conv{i}_w"]                      # [2H, H, K]  (torch Conv1d layout)
        b = p[f"conv{i}_b"]                      # [2H]
        m = jnp.transpose(w, (2, 1, 0))          # [K, H_in, 2H_out]
        wa.append(m[:, :, :H])
        wg.append(m[:, :, H:])
        ba.append(b[:H].reshape(1, H))
        bg.append(b[H:].reshape(1, H))
    return dict(
        w_e2h=p["emb2hid_w"].astype(jnp.bfloat16),
        b_e2h=p["emb2hid_b"].reshape(1, -1).astype(jnp.float32),
        wa=jnp.concatenate(wa, axis=0).astype(jnp.bfloat16),    # [N_LAYERS*K, H, H]
        wg=jnp.concatenate(wg, axis=0).astype(jnp.bfloat16),
        ba=jnp.stack(ba, axis=0).astype(jnp.float32),           # [N_LAYERS, 1, H]
        bg=jnp.stack(bg, axis=0).astype(jnp.float32),
        w_h2e=p["hid2emb_w"].astype(jnp.bfloat16),
        b_h2e=p["hid2emb_b"].reshape(1, -1).astype(jnp.float32),
    )


def encoder_forward(p, src):
    B, S = src.shape
    E = p["tok_emb"].shape[1]
    H = p["emb2hid_w"].shape[1]

    # Embedding lookups stay in XLA (gather).
    # TODO(synk): dropout is eval-mode identity; training-mode masks not implemented.
    tok = jnp.take(p["tok_emb"], src, axis=0)                       # [B, S, E]
    pos = jnp.take(p["pos_emb"], jnp.arange(S), axis=0)[None]       # [1, S, E]
    embedded = (tok + pos).astype(jnp.float32)

    q = _pack_params(p)
    NLK = N_LAYERS * K

    conved, combined = pl.pallas_call(
        _encoder_kernel,
        out_shape=(jax.ShapeDtypeStruct((B, S, E), jnp.float32),
                   jax.ShapeDtypeStruct((B, S, E), jnp.float32)),
        grid=(B,),
        in_specs=[
            pl.BlockSpec((1, S, E), lambda b: (b, 0, 0)),
            pl.BlockSpec((E, H), lambda b: (0, 0)),
            pl.BlockSpec((1, H), lambda b: (0, 0)),
            pl.BlockSpec((NLK, H, H), lambda b: (0, 0, 0)),
            pl.BlockSpec((NLK, H, H), lambda b: (0, 0, 0)),
            pl.BlockSpec((N_LAYERS, 1, H), lambda b: (0, 0, 0)),
            pl.BlockSpec((N_LAYERS, 1, H), lambda b: (0, 0, 0)),
            pl.BlockSpec((H, E), lambda b: (0, 0)),
            pl.BlockSpec((1, E), lambda b: (0, 0)),
        ],
        out_specs=(pl.BlockSpec((1, S, E), lambda b: (b, 0, 0)),
                   pl.BlockSpec((1, S, E), lambda b: (b, 0, 0))),
        compiler_params=pltpu.CompilerParams(
            dimension_semantics=("parallel",),
            vmem_limit_bytes=32 * 1024 * 1024),
    )(embedded, q["w_e2h"], q["b_e2h"], q["wa"], q["wg"], q["ba"], q["bg"],
      q["w_h2e"], q["b_h2e"])
    return conved, combined


# --------------------------- pure-JAX f32 reference ---------------------------

def encoder_reference(p, src):
    B, S = src.shape
    H = p["emb2hid_w"].shape[1]
    tok = jnp.take(p["tok_emb"], src, axis=0)
    pos = jnp.take(p["pos_emb"], jnp.arange(S), axis=0)[None]
    embedded = tok + pos
    x = embedded @ p["emb2hid_w"] + p["emb2hid_b"]
    for i in range(N_LAYERS):
        w = p[f"conv{i}_w"]                      # [2H, H, K]
        b = p[f"conv{i}_b"]
        xp = jnp.pad(x, ((0, 0), (1, 1), (0, 0)))
        y = b
        for k in range(K):
            y = y + xp[:, k:k + S, :] @ w[:, :, k].T
        glu = y[..., :H] * jax.nn.sigmoid(y[..., H:])
        x = (glu + x) * SCALE
    conved = x @ p["hid2emb_w"] + p["hid2emb_b"]
    combined = (conved + embedded) * SCALE
    return conved, combined


# --------------------------------- param init --------------------------------

def init_params(key, vocab, E, H, max_len=128):
    shapes = {
        "tok_emb": (vocab, E),
        "pos_emb": (max_len, E),
        "emb2hid_w": (E, H), "emb2hid_b": (H,),
        "hid2emb_w": (H, E), "hid2emb_b": (E,),
    }
    for i in range(N_LAYERS):
        shapes[f"conv{i}_w"] = (2 * H, H, K)
        shapes[f"conv{i}_b"] = (2 * H,)
    params = {}
    keys = jax.random.split(key, len(shapes))
    for k_i, (name, shape) in zip(keys, sorted(shapes.items())):
        params[name] = (0.1 * jax.random.normal(k_i, shape)).astype(jnp.float32)
    return params


# ------------------------------------ main ------------------------------------

if __name__ == "__main__":
    B, S = 2, 8
    E, H = 32, 32
    VOCAB = 53
    MAX_LEN = 128

    key = jax.random.PRNGKey(0)
    k_param, k_src = jax.random.split(key)
    params = init_params(k_param, VOCAB, E, H, MAX_LEN)
    src = jax.random.randint(k_src, (B, S), 0, VOCAB, dtype=jnp.int32)

    conved, combined = jax.jit(encoder_forward)(params, src)
    jax.block_until_ready((conved, combined))

    ref_conved, ref_combined = jax.jit(encoder_reference)(params, src)
    jax.block_until_ready((ref_conved, ref_combined))

    assert conved.shape == (B, S, E)
    assert combined.shape == (B, S, E)
    # bf16 MXU operands with f32 accumulation -> loose-but-meaningful tolerance
    assert np.allclose(np.asarray(conved), np.asarray(ref_conved),
                       rtol=2e-2, atol=2e-2), "conved mismatch vs f32 reference"
    assert np.allclose(np.asarray(combined), np.asarray(ref_combined),
                       rtol=2e-2, atol=2e-2), "combined mismatch vs f32 reference"

    print("KERNEL_OK")
</pallas_src>

<mosaic_0001>
module attributes {stable_mosaic.version = 11 : i64} {
  func.func @_encoder_kernel(%arg0: i32, %arg1: memref<1x8x32xf32, #tpu.memory_space<vmem>>, %arg2: memref<32x32xbf16, #tpu.memory_space<vmem>>, %arg3: memref<1x32xf32, #tpu.memory_space<vmem>>, %arg4: memref<6x32x32xbf16, #tpu.memory_space<vmem>>, %arg5: memref<6x32x32xbf16, #tpu.memory_space<vmem>>, %arg6: memref<2x1x32xf32, #tpu.memory_space<vmem>>, %arg7: memref<2x1x32xf32, #tpu.memory_space<vmem>>, %arg8: memref<32x32xbf16, #tpu.memory_space<vmem>>, %arg9: memref<1x32xf32, #tpu.memory_space<vmem>>, %arg10: memref<1x8x32xf32, #tpu.memory_space<vmem>>, %arg11: memref<1x8x32xf32, #tpu.memory_space<vmem>>) attributes {dimension_semantics = [#tpu.dimension_semantics<parallel>], iteration_bounds = array<i64: 2>, scalar_prefetch = 0 : i64, scratch_operands = 0 : i64, tpu.core_type = #tpu.core_type<tc>, window_params = [{transform_indices = @transform_0, window_bounds = array<i64: 1, 8, 32>}, {pipeline_mode = #tpu.pipeline_mode<synchronous>, transform_indices = @transform_1, window_bounds = array<i64: 32, 32>}, {pipeline_mode = #tpu.pipeline_mode<synchronous>, transform_indices = @transform_2, window_bounds = array<i64: 1, 32>}, {pipeline_mode = #tpu.pipeline_mode<synchronous>, transform_indices = @transform_3, window_bounds = array<i64: 6, 32, 32>}, {pipeline_mode = #tpu.pipeline_mode<synchronous>, transform_indices = @transform_4, window_bounds = array<i64: 6, 32, 32>}, {pipeline_mode = #tpu.pipeline_mode<synchronous>, transform_indices = @transform_5, window_bounds = array<i64: 2, 1, 32>}, {pipeline_mode = #tpu.pipeline_mode<synchronous>, transform_indices = @transform_6, window_bounds = array<i64: 2, 1, 32>}, {pipeline_mode = #tpu.pipeline_mode<synchronous>, transform_indices = @transform_7, window_bounds = array<i64: 32, 32>}, {pipeline_mode = #tpu.pipeline_mode<synchronous>, transform_indices = @transform_8, window_bounds = array<i64: 1, 32>}, {transform_indices = @transform_9, window_bounds = array<i64: 1, 8, 32>}, {transform_indices = @transform_10, window_bounds = array<i64: 1, 8, 32>}]} {
    %c0 = arith.constant 0 : index
    %c0_0 = arith.constant 0 : index
    %c0_1 = arith.constant 0 : index
    %0 = vector.load %arg1[%c0, %c0_0, %c0_1] : memref<1x8x32xf32, #tpu.memory_space<vmem>>, vector<1x8x32xf32>
    %1 = vector.shape_cast %0 : vector<1x8x32xf32> to vector<8x32xf32>
    %2 = arith.truncf %1 : vector<8x32xf32> to vector<8x32xbf16>
    %c0_2 = arith.constant 0 : index
    %c0_3 = arith.constant 0 : index
    %3 = vector.load %arg2[%c0_2, %c0_3] : memref<32x32xbf16, #tpu.memory_space<vmem>>, vector<32x32xbf16>
    %cst = arith.constant dense<0.000000e+00> : vector<8x32xf32>
    %4 = tpu.matmul %2, %3, %cst {dimension_numbers = #tpu.dot_dimension_numbers<[1], [0], [0], [1], [0, 0, 1, 1], [], []>} : vector<8x32xbf16>, vector<32x32xbf16>, vector<8x32xf32> -> vector<8x32xf32>
    %c0_4 = arith.constant 0 : index
    %c0_5 = arith.constant 0 : index
    %5 = vector.load %arg3[%c0_4, %c0_5] : memref<1x32xf32, #tpu.memory_space<vmem>>, vector<1x32xf32>
    %6 = vector.broadcast %5 : vector<1x32xf32> to vector<8x32xf32>
    %7 = arith.addf %4, %6 : vector<8x32xf32>
    %cst_6 = arith.constant 0.000000e+00 : f32
    %8 = vector.broadcast %cst_6 : f32 to vector<1x32xf32>
    %9 = vector.extract_strided_slice %7 {offsets = [0, 0], sizes = [7, 32], strides = [1, 1]} : vector<8x32xf32> to vector<7x32xf32>
    %10 = tpu.concatenate %8, %9 in 0 : vector<1x32xf32>, vector<7x32xf32> -> vector<8x32xf32>
    %11 = vector.extract_strided_slice %7 {offsets = [1, 0], sizes = [7, 32], strides = [1, 1]} : vector<8x32xf32> to vector<7x32xf32>
    %12 = tpu.concatenate %11, %8 in 0 : vector<7x32xf32>, vector<1x32xf32> -> vector<8x32xf32>
    %13 = arith.truncf %10 : vector<8x32xf32> to vector<8x32xbf16>
    %14 = arith.truncf %7 : vector<8x32xf32> to vector<8x32xbf16>
    %15 = arith.truncf %12 : vector<8x32xf32> to vector<8x32xbf16>
    %c0_7 = arith.constant 0 : index
    %c0_8 = arith.constant 0 : index
    %c0_9 = arith.constant 0 : index
    %16 = vector.load %arg6[%c0_7, %c0_8, %c0_9] : memref<2x1x32xf32, #tpu.memory_space<vmem>>, vector<1x1x32xf32>
    %17 = vector.shape_cast %16 : vector<1x1x32xf32> to vector<1x32xf32>
    %c0_10 = arith.constant 0 : index
    %c0_11 = arith.constant 0 : index
    %c0_12 = arith.constant 0 : index
    %18 = vector.load %arg7[%c0_10, %c0_11, %c0_12] : memref<2x1x32xf32, #tpu.memory_space<vmem>>, vector<1x1x32xf32>
    %19 = vector.shape_cast %18 : vector<1x1x32xf32> to vector<1x32xf32>
    %c0_13 = arith.constant 0 : index
    %c0_14 = arith.constant 0 : index
    %c0_15 = arith.constant 0 : index
    %20 = vector.load %arg4[%c0_13, %c0_14, %c0_15] : memref<6x32x32xbf16, #tpu.memory_space<vmem>>, vector<1x32x32xbf16>
    %21 = vector.shape_cast %20 : vector<1x32x32xbf16> to vector<32x32xbf16>
    %cst_16 = arith.constant dense<0.000000e+00> : vector<8x32xf32>
    %22 = tpu.matmul %13, %21, %cst_16 {dimension_numbers = #tpu.dot_dimension_numbers<[1], [0], [0], [1], [0, 0, 1, 1], [], []>} : vector<8x32xbf16>, vector<32x32xbf16>, vector<8x32xf32> -> vector<8x32xf32>
    %23 = vector.broadcast %17 : vector<1x32xf32> to vector<8x32xf32>
    %24 = arith.addf %23, %22 : vector<8x32xf32>
    %c0_17 = arith.constant 0 : index
    %c0_18 = arith.constant 0 : index
    %c0_19 = arith.constant 0 : index
    %25 = vector.load %arg5[%c0_17, %c0_18, %c0_19] : memref<6x32x32xbf16, #tpu.memory_space<vmem>>, vector<1x32x32xbf16>
    %26 = vector.shape_cast %25 : vector<1x32x32xbf16> to vector<32x32xbf16>
    %cst_20 = arith.constant dense<0.000000e+00> : vector<8x32xf32>
    %27 = tpu.matmul %13, %26, %cst_20 {dimension_numbers = #tpu.dot_dimension_numbers<[1], [0], [0], [1], [0, 0, 1, 1], [], []>} : vector<8x32xbf16>, vector<32x32xbf16>, vector<8x32xf32> -> vector<8x32xf32>
    %28 = vector.broadcast %19 : vector<1x32xf32> to vector<8x32xf32>
    %29 = arith.addf %28, %27 : vector<8x32xf32>
    %c1 = arith.constant 1 : index
    %c0_21 = arith.constant 0 : index
    %c0_22 = arith.constant 0 : index
    %30 = vector.load %arg4[%c1, %c0_21, %c0_22] : memref<6x32x32xbf16, #tpu.memory_space<vmem>>, vector<1x32x32xbf16>
    %31 = vector.shape_cast %30 : vector<1x32x32xbf16> to vector<32x32xbf16>
    %cst_23 = arith.constant dense<0.000000e+00> : vector<8x32xf32>
    %32 = tpu.matmul %14, %31, %cst_23 {dimension_numbers = #tpu.dot_dimension_numbers<[1], [0], [0], [1], [0, 0, 1, 1], [], []>} : vector<8x32xbf16>, vector<32x32xbf16>, vector<8x32xf32> -> vector<8x32xf32>
    %33 = arith.addf %24, %32 : vector<8x32xf32>
    %c1_24 = arith.constant 1 : index
    %c0_25 = arith.constant 0 : index
    %c0_26 = arith.constant 0 : index
    %34 = vector.load %arg5[%c1_24, %c0_25, %c0_26] : memref<6x32x32xbf16, #tpu.memory_space<vmem>>, vector<1x32x32xbf16>
    %35 = vector.shape_cast %34 : vector<1x32x32xbf16> to vector<32x32xbf16>
    %cst_27 = arith.constant dense<0.000000e+00> : vector<8x32xf32>
    %36 = tpu.matmul %14, %35, %cst_27 {dimension_numbers = #tpu.dot_dimension_numbers<[1], [0], [0], [1], [0, 0, 1, 1], [], []>} : vector<8x32xbf16>, vector<32x32xbf16>, vector<8x32xf32> -> vector<8x32xf32>
    %37 = arith.addf %29, %36 : vector<8x32xf32>
    %c2 = arith.constant 2 : index
    %c0_28 = arith.constant 0 : index
    %c0_29 = arith.constant 0 : index
    %38 = vector.load %arg4[%c2, %c0_28, %c0_29] : memref<6x32x32xbf16, #tpu.memory_space<vmem>>, vector<1x32x32xbf16>
    %39 = vector.shape_cast %38 : vector<1x32x32xbf16> to vector<32x32xbf16>
    %cst_30 = arith.constant dense<0.000000e+00> : vector<8x32xf32>
    %40 = tpu.matmul %15, %39, %cst_30 {dimension_numbers = #tpu.dot_dimension_numbers<[1], [0], [0], [1], [0, 0, 1, 1], [], []>} : vector<8x32xbf16>, vector<32x32xbf16>, vector<8x32xf32> -> vector<8x32xf32>
    %41 = arith.addf %33, %40 : vector<8x32xf32>
    %c2_31 = arith.constant 2 : index
    %c0_32 = arith.constant 0 : index
    %c0_33 = arith.constant 0 : index
    %42 = vector.load %arg5[%c2_31, %c0_32, %c0_33] : memref<6x32x32xbf16, #tpu.memory_space<vmem>>, vector<1x32x32xbf16>
    %43 = vector.shape_cast %42 : vector<1x32x32xbf16> to vector<32x32xbf16>
    %cst_34 = arith.constant dense<0.000000e+00> : vector<8x32xf32>
    %44 = tpu.matmul %15, %43, %cst_34 {dimension_numbers = #tpu.dot_dimension_numbers<[1], [0], [0], [1], [0, 0, 1, 1], [], []>} : vector<8x32xbf16>, vector<32x32xbf16>, vector<8x32xf32> -> vector<8x32xf32>
    %45 = arith.addf %37, %44 : vector<8x32xf32>
    %46 = arith.negf %45 : vector<8x32xf32>
    %47 = math.exp %46 : vector<8x32xf32>
    %cst_35 = arith.constant 1.000000e+00 : f32
    %48 = vector.broadcast %cst_35 : f32 to vector<8x32xf32>
    %49 = arith.addf %48, %47 : vector<8x32xf32>
    %50 = arith.divf %48, %49 : vector<8x32xf32>
    %51 = arith.mulf %41, %50 : vector<8x32xf32>
    %52 = arith.addf %51, %7 : vector<8x32xf32>
    %cst_36 = arith.constant 0.707106769 : f32
    %53 = vector.broadcast %cst_36 : f32 to vector<8x32xf32>
    %54 = arith.mulf %52, %53 : vector<8x32xf32>
    %55 = vector.extract_strided_slice %54 {offsets = [0, 0], sizes = [7, 32], strides = [1, 1]} : vector<8x32xf32> to vector<7x32xf32>
    %56 = tpu.concatenate %8, %55 in 0 : vector<1x32xf32>, vector<7x32xf32> -> vector<8x32xf32>
    %57 = vector.extract_strided_slice %54 {offsets = [1, 0], sizes = [7, 32], strides = [1, 1]} : vector<8x32xf32> to vector<7x32xf32>
    %58 = tpu.concatenate %57, %8 in 0 : vector<7x32xf32>, vector<1x32xf32> -> vector<8x32xf32>
    %59 = arith.truncf %56 : vector<8x32xf32> to vector<8x32xbf16>
    %60 = arith.truncf %54 : vector<8x32xf32> to vector<8x32xbf16>
    %61 = arith.truncf %58 : vector<8x32xf32> to vector<8x32xbf16>
    %c1_37 = arith.constant 1 : index
    %c0_38 = arith.constant 0 : index
    %c0_39 = arith.constant 0 : index
    %62 = vector.load %arg6[%c1_37, %c0_38, %c0_39] : memref<2x1x32xf32, #tpu.memory_space<vmem>>, vector<1x1x32xf32>
    %63 = vector.shape_cast %62 : vector<1x1x32xf32> to vector<1x32xf32>
    %c1_40 = arith.constant 1 : index
    %c0_41 = arith.constant 0 : index
    %c0_42 = arith.constant 0 : index
    %64 = vector.load %arg7[%c1_40, %c0_41, %c0_42] : memref<2x1x32xf32, #tpu.memory_space<vmem>>, vector<1x1x32xf32>
    %65 = vector.shape_cast %64 : vector<1x1x32xf32> to vector<1x32xf32>
    %c3 = arith.constant 3 : index
    %c0_43 = arith.constant 0 : index
    %c0_44 = arith.constant 0 : index
    %66 = vector.load %arg4[%c3, %c0_43, %c0_44] : memref<6x32x32xbf16, #tpu.memory_space<vmem>>, vector<1x32x32xbf16>
    %67 = vector.shape_cast %66 : vector<1x32x32xbf16> to vector<32x32xbf16>
    %cst_45 = arith.constant dense<0.000000e+00> : vector<8x32xf32>
    %68 = tpu.matmul %59, %67, %cst_45 {dimension_numbers = #tpu.dot_dimension_numbers<[1], [0], [0], [1], [0, 0, 1, 1], [], []>} : vector<8x32xbf16>, vector<32x32xbf16>, vector<8x32xf32> -> vector<8x32xf32>
    %69 = vector.broadcast %63 : vector<1x32xf32> to vector<8x32xf32>
    %70 = arith.addf %69, %68 : vector<8x32xf32>
    %c3_46 = arith.constant 3 : index
    %c0_47 = arith.constant 0 : index
    %c0_48 = arith.constant 0 : index
    %71 = vector.load %arg5[%c3_46, %c0_47, %c0_48] : memref<6x32x32xbf16, #tpu.memory_space<vmem>>, vector<1x32x32xbf16>
    %72 = vector.shape_cast %71 : vector<1x32x32xbf16> to vector<32x32xbf16>
    %cst_49 = arith.constant dense<0.000000e+00> : vector<8x32xf32>
    %73 = tpu.matmul %59, %72, %cst_49 {dimension_numbers = #tpu.dot_dimension_numbers<[1], [0], [0], [1], [0, 0, 1, 1], [], []>} : vector<8x32xbf16>, vector<32x32xbf16>, vector<8x32xf32> -> vector<8x32xf32>
    %74 = vector.broadcast %65 : vector<1x32xf32> to vector<8x32xf32>
    %75 = arith.addf %74, %73 : vector<8x32xf32>
    %c4 = arith.constant 4 : index
    %c0_50 = arith.constant 0 : index
    %c0_51 = arith.constant 0 : index
    %76 = vector.load %arg4[%c4, %c0_50, %c0_51] : memref<6x32x32xbf16, #tpu.memory_space<vmem>>, vector<1x32x32xbf16>
    %77 = vector.shape_cast %76 : vector<1x32x32xbf16> to vector<32x32xbf16>
    %cst_52 = arith.constant dense<0.000000e+00> : vector<8x32xf32>
    %78 = tpu.matmul %60, %77, %cst_52 {dimension_numbers = #tpu.dot_dimension_numbers<[1], [0], [0], [1], [0, 0, 1, 1], [], []>} : vector<8x32xbf16>, vector<32x32xbf16>, vector<8x32xf32> -> vector<8x32xf32>
    %79 = arith.addf %70, %78 : vector<8x32xf32>
    %c4_53 = arith.constant 4 : index
    %c0_54 = arith.constant 0 : index
    %c0_55 = arith.constant 0 : index
    %80 = vector.load %arg5[%c4_53, %c0_54, %c0_55] : memref<6x32x32xbf16, #tpu.memory_space<vmem>>, vector<1x32x32xbf16>
    %81 = vector.shape_cast %80 : vector<1x32x32xbf16> to vector<32x32xbf16>
    %cst_56 = arith.constant dense<0.000000e+00> : vector<8x32xf32>
    %82 = tpu.matmul %60, %81, %cst_56 {dimension_numbers = #tpu.dot_dimension_numbers<[1], [0], [0], [1], [0, 0, 1, 1], [], []>} : vector<8x32xbf16>, vector<32x32xbf16>, vector<8x32xf32> -> vector<8x32xf32>
    %83 = arith.addf %75, %82 : vector<8x32xf32>
    %c5 = arith.constant 5 : index
    %c0_57 = arith.constant 0 : index
    %c0_58 = arith.constant 0 : index
    %84 = vector.load %arg4[%c5, %c0_57, %c0_58] : memref<6x32x32xbf16, #tpu.memory_space<vmem>>, vector<1x32x32xbf16>
    %85 = vector.shape_cast %84 : vector<1x32x32xbf16> to vector<32x32xbf16>
    %cst_59 = arith.constant dense<0.000000e+00> : vector<8x32xf32>
    %86 = tpu.matmul %61, %85, %cst_59 {dimension_numbers = #tpu.dot_dimension_numbers<[1], [0], [0], [1], [0, 0, 1, 1], [], []>} : vector<8x32xbf16>, vector<32x32xbf16>, vector<8x32xf32> -> vector<8x32xf32>
    %87 = arith.addf %79, %86 : vector<8x32xf32>
    %c5_60 = arith.constant 5 : index
    %c0_61 = arith.constant 0 : index
    %c0_62 = arith.constant 0 : index
    %88 = vector.load %arg5[%c5_60, %c0_61, %c0_62] : memref<6x32x32xbf16, #tpu.memory_space<vmem>>, vector<1x32x32xbf16>
    %89 = vector.shape_cast %88 : vector<1x32x32xbf16> to vector<32x32xbf16>
    %cst_63 = arith.constant dense<0.000000e+00> : vector<8x32xf32>
    %90 = tpu.matmul %61, %89, %cst_63 {dimension_numbers = #tpu.dot_dimension_numbers<[1], [0], [0], [1], [0, 0, 1, 1], [], []>} : vector<8x32xbf16>, vector<32x32xbf16>, vector<8x32xf32> -> vector<8x32xf32>
    %91 = arith.addf %83, %90 : vector<8x32xf32>
    %92 = arith.negf %91 : vector<8x32xf32>
    %93 = math.exp %92 : vector<8x32xf32>
    %cst_64 = arith.constant 1.000000e+00 : f32
    %94 = vector.broadcast %cst_64 : f32 to vector<8x32xf32>
    %95 = arith.addf %94, %93 : vector<8x32xf32>
    %96 = arith.divf %94, %95 : vector<8x32xf32>
    %97 = arith.mulf %87, %96 : vector<8x32xf32>
    %98 = arith.addf %97, %54 : vector<8x32xf32>
    %cst_65 = arith.constant 0.707106769 : f32
    %99 = vector.broadcast %cst_65 : f32 to vector<8x32xf32>
    %100 = arith.mulf %98, %99 : vector<8x32xf32>
    %101 = arith.truncf %100 : vector<8x32xf32> to vector<8x32xbf16>
    %c0_66 = arith.constant 0 : index
    %c0_67 = arith.constant 0 : index
    %102 = vector.load %arg8[%c0_66, %c0_67] : memref<32x32xbf16, #tpu.memory_space<vmem>>, vector<32x32xbf16>
    %cst_68 = arith.constant dense<0.000000e+00> : vector<8x32xf32>
    %103 = tpu.matmul %101, %102, %cst_68 {dimension_numbers = #tpu.dot_dimension_numbers<[1], [0], [0], [1], [0, 0, 1, 1], [], []>} : vector<8x32xbf16>, vector<32x32xbf16>, vector<8x32xf32> -> vector<8x32xf32>
    %c0_69 = arith.constant 0 : index
    %c0_70 = arith.constant 0 : index
    %104 = vector.load %arg9[%c0_69, %c0_70] : memref<1x32xf32, #tpu.memory_space<vmem>>, vector<1x32xf32>
    %105 = vector.broadcast %104 : vector<1x32xf32> to vector<8x32xf32>
    %106 = arith.addf %103, %105 : vector<8x32xf32>
    %c0_71 = arith.constant 0 : index
    %c0_72 = arith.constant 0 : index
    %c0_73 = arith.constant 0 : index
    %107 = vector.load %arg10[%c0_71, %c0_72, %c0_73] : memref<1x8x32xf32, #tpu.memory_space<vmem>>, vector<1x8x32xf32>
    %108 = vector.shape_cast %107 : vector<1x8x32xf32> to vector<8x32xf32>
    %109 = vector.shape_cast %106 : vector<8x32xf32> to vector<1x8x32xf32>
    tpu.vector_store %arg10[%c0_71, %c0_72, %c0_73], %109 {strides = array<i32>} : memref<1x8x32xf32, #tpu.memory_space<vmem>>, vector<1x8x32xf32>,
    %110 = arith.addf %106, %1 : vector<8x32xf32>
    %cst_74 = arith.constant 0.707106769 : f32
    %111 = vector.broadcast %cst_74 : f32 to vector<8x32xf32>
    %112 = arith.mulf %110, %111 : vector<8x32xf32>
    %c0_75 = arith.constant 0 : index
    %c0_76 = arith.constant 0 : index
    %c0_77 = arith.constant 0 : index
    %113 = vector.load %arg11[%c0_75, %c0_76, %c0_77] : memref<1x8x32xf32, #tpu.memory_space<vmem>>, vector<1x8x32xf32>
    %114 = vector.shape_cast %113 : vector<1x8x32xf32> to vector<8x32xf32>
    %115 = vector.shape_cast %112 : vector<8x32xf32> to vector<1x8x32xf32>
    tpu.vector_store %arg11[%c0_75, %c0_76, %c0_77], %115 {strides = array<i32>} : memref<1x8x32xf32, #tpu.memory_space<vmem>>, vector<1x8x32xf32>,
    return
  }
  func.func @transform_0(%arg0: i32) -> (i32, i32, i32) {
    %c0_i32 = arith.constant 0 : i32
    %c0_i32_0 = arith.constant 0 : i32
    %c0_i32_1 = arith.constant 0 : i32
    return %arg0, %c0_i32, %c0_i32_0 : i32, i32, i32
  }
  func.func @transform_1(%arg0: i32) -> (i32, i32) {
    %c0_i32 = arith.constant 0 : i32
    %c0_i32_0 = arith.constant 0 : i32
    %c0_i32_1 = arith.constant 0 : i32
    return %c0_i32, %c0_i32_0 : i32, i32
  }
  func.func @transform_2(%arg0: i32) -> (i32, i32) {
    %c0_i32 = arith.constant 0 : i32
    %c0_i32_0 = arith.constant 0 : i32
    %c0_i32_1 = arith.constant 0 : i32
    return %c0_i32, %c0_i32_0 : i32, i32
  }
  func.func @transform_3(%arg0: i32) -> (i32, i32, i32) {
    %c0_i32 = arith.constant 0 : i32
    %c0_i32_0 = arith.constant 0 : i32
    %c0_i32_1 = arith.constant 0 : i32
    %c0_i32_2 = arith.constant 0 : i32
    return %c0_i32, %c0_i32_0, %c0_i32_1 : i32, i32, i32
  }
  func.func @transform_4(%arg0: i32) -> (i32, i32, i32) {
    %c0_i32 = arith.constant 0 : i32
    %c0_i32_0 = arith.constant 0 : i32
    %c0_i32_1 = arith.constant 0 : i32
    %c0_i32_2 = arith.constant 0 : i32
    return %c0_i32, %c0_i32_0, %c0_i32_1 : i32, i32, i32
  }
  func.func @transform_5(%arg0: i32) -> (i32, i32, i32) {
    %c0_i32 = arith.constant 0 : i32
    %c0_i32_0 = arith.constant 0 : i32
    %c0_i32_1 = arith.constant 0 : i32
    %c0_i32_2 = arith.constant 0 : i32
    return %c0_i32, %c0_i32_0, %c0_i32_1 : i32, i32, i32
  }
  func.func @transform_6(%arg0: i32) -> (i32, i32, i32) {
    %c0_i32 = arith.constant 0 : i32
    %c0_i32_0 = arith.constant 0 : i32
    %c0_i32_1 = arith.constant 0 : i32
    %c0_i32_2 = arith.constant 0 : i32
    return %c0_i32, %c0_i32_0, %c0_i32_1 : i32, i32, i32
  }
  func.func @transform_7(%arg0: i32) -> (i32, i32) {
    %c0_i32 = arith.constant 0 : i32
    %c0_i32_0 = arith.constant 0 : i32
    %c0_i32_1 = arith.constant 0 : i32
    return %c0_i32, %c0_i32_0 : i32, i32
  }
  func.func @transform_8(%arg0: i32) -> (i32, i32) {
    %c0_i32 = arith.constant 0 : i32
    %c0_i32_0 = arith.constant 0 : i32
    %c0_i32_1 = arith.constant 0 : i32
    return %c0_i32, %c0_i32_0 : i32, i32
  }
  func.func @transform_9(%arg0: i32) -> (i32, i32, i32) {
    %c0_i32 = arith.constant 0 : i32
    %c0_i32_0 = arith.constant 0 : i32
    %c0_i32_1 = arith.constant 0 : i32
    return %arg0, %c0_i32, %c0_i32_0 : i32, i32, i32
  }
  func.func @transform_10(%arg0: i32) -> (i32, i32, i32) {
    %c0_i32 = arith.constant 0 : i32
    %c0_i32_0 = arith.constant 0 : i32
    %c0_i32_1 = arith.constant 0 : i32
    return %arg0, %c0_i32, %c0_i32_0 : i32, i32, i32
  }
}

</mosaic_0001>

<llo_original>
// kernel: encoder_forward.1
$region0: #{encoder_forward.1}
  #allocation0 [shape = 'u32[]', space=smem, size = 0x4, offset = 0x4, fixed_abs, tag = 'smem constant byte address 0x4 - core index']
  #allocation1 [shape = 'u32[144,128]{1,0:T(1,128)}', space=vmem, size = 0x12000, scoped, tag = 'internal scratch']
  %s0 = inlined_call_operand.vmem [shape: f32[2,8,32], index: 0, kind: input, shape index: {}]
  %s1 = inlined_call_operand.vmem [shape: bf16[32,32], index: 1, kind: input, shape index: {}]
  %s2 = inlined_call_operand.vmem [shape: f32[1,32], index: 2, kind: input, shape index: {}]
  %s3 = inlined_call_operand.vmem [shape: bf16[6,32,32], index: 3, kind: input, shape index: {}]
  %s4 = inlined_call_operand.vmem [shape: bf16[6,32,32], index: 4, kind: input, shape index: {}]
  %s5 = inlined_call_operand.vmem [shape: f32[2,1,32], index: 5, kind: input, shape index: {}]
  %s6 = inlined_call_operand.vmem [shape: f32[2,1,32], index: 6, kind: input, shape index: {}]
  %s7 = inlined_call_operand.vmem [shape: bf16[32,32], index: 7, kind: input, shape index: {}]
  %s8 = inlined_call_operand.vmem [shape: f32[1,32], index: 8, kind: input, shape index: {}]
  %s9 = inlined_call_operand.hbm [shape: f32[2,8,32], index: 9, kind: output, shape index: {0}]
  %s10 = inlined_call_operand.hbm [shape: f32[2,8,32], index: 10, kind: output, shape index: {1}]
  %11 = xla_tuple %s9, %s10
  %s12 = sld [smem:[#allocation0]]
  $region77: #{encoder_forward.1} parent=0
    _
  %s14 = ssub.s32 1, %s12
  %s15 = scalar_select 0, %s14, %s12
  $region1: #{encoder_forward.1} parent=0
    #allocation2 [shape = 'u8[8192]{0}', space=vmem, size = 0x2000, scoped, tag = 'output window, operand 0']
    #allocation3 [shape = 's32[2]{0}', space=sflag, size = 0x8, scoped, tag = 'scoped memory for encoder_forward.1']
    #allocation4 [shape = 'u8[8192]{0}', space=vmem, size = 0x2000, scoped, tag = 'output window, operand 1']
    #allocation5 [shape = 's32[2]{0}', space=sflag, size = 0x8, scoped, tag = 'scoped memory for encoder_forward.1']
    %16 = vsyncpa [#allocation3], 0
    %s17 = scalar_lea.sflag [#allocation3], 1
    %18 = vsyncpa %s17, 0
    %19 = vsyncpa [#allocation5], 0
    %s20 = scalar_lea.sflag [#allocation5], 1
    %21 = vsyncpa %s20, 0
    loop: start=0, step=1, limit=4
    $region2: #{encoder_forward.1} parent=1 // loop_pre_header
      _
    $region3: #{encoder_forward.1} parent=1 // loop_header
      %s23 = sphi 0, %s27
      %p24 = scmp.ge.s32.totalorder %s23, 4
      %s33 = sphi 0, %s35
      %s36 = sphi 0, %s33
      %s37 = sphi 0, %s36
      %s53 = sphi 0, %s37
      %s57 = sphi 0, %s57
      %s59 = sphi 0, %s57
      %s60 = sphi 0, %s59
      %s74 = sphi 0, %s60
      %s78 = sphi 0, %s78
      %s80 = sphi 0, %s78
      %s81 = sphi 0, %s80
      %s95 = sphi 0, %s81
      %s99 = sphi 0, %s99
      %s101 = sphi 0, %s99
      %s102 = sphi 0, %s101
      %s116 = sphi 0, %s102
      %s120 = sphi 0, %s120
      %s122 = sphi 0, %s120
      %s123 = sphi 0, %s122
      %s137 = sphi 0, %s123
      %s141 = sphi 0, %s141
      %s143 = sphi 0, %s141
      %s144 = sphi 0, %s143
      %s158 = sphi 0, %s144
      %s162 = sphi 0, %s162
      %s164 = sphi 0, %s162
      %s165 = sphi 0, %s164
      %s179 = sphi 0, %s165
      %s183 = sphi 0, %s183
      %s185 = sphi 0, %s183
      %s186 = sphi 0, %s185
      %s200 = sphi 0, %s186
      %s204 = sphi 0, %s204
      %s206 = sphi 0, %s204
      %s207 = sphi 0, %s206
      %s221 = sphi 0, %s207
      %s227 = sphi 0, %s229
      %s230 = sphi 0, %s227
      %s231 = sphi 0, %s230
      %s247 = sphi 0, %s231
      %s253 = sphi 0, %s255
      %s256 = sphi 0, %s253
      %s257 = sphi 0, %s256
      %s273 = sphi 0, %s257
    $region4: #{encoder_forward.1} parent=1 // loop_header_branch
      %26 = sbr.rel (%p24) target = $region8
    $region5: #{encoder_forward.1} parent=1 // loop_body
      %s28 = ssub.s32 %s23, 1
      %s29 = ssub.s32 %s23, 2
      %s30 = sadd.s32 %s23, 1
      %s31 = ssub.s32 %s23, %s30
      %p32 = scmp.eq.s32.totalorder %s31, 0
      %s34 = sadd.s32 %s33, 1
      %s35 = scalar_select %p32, %s33, %s34
      %p38 = pneg %p32
      %p39 = scmp.eq.s32.totalorder %s23, 1
      %p40 = por %p38, %p39
      %p41 = scmp.ne.s32.totalorder %s33, %s36
      %p42 = scmp.eq.s32.totalorder %s23, 0
      %p43 = por %p41, %p42
      %p44 = scmp.ne.s32.totalorder %s33, %s36
      %p45 = scmp.eq.s32.totalorder %s28, 1
      %p46 = por %p44, %p45
      %p47 = scmp.ne.s32.totalorder %s36, %s37
      %p48 = scmp.eq.s32.totalorder %s28, 0
      %p49 = por %p47, %p48
      %p50 = scmp.ne.s32.totalorder %s36, %s37
      %p51 = scmp.eq.s32.totalorder %s29, 1
      %p52 = por %p50, %p51
      %p54 = scmp.ne.s32.totalorder %s37, %s53
      %p55 = scmp.eq.s32.totalorder %s29, 0
      %p56 = por %p54, %p55
      %s58 = sadd.s32 %s57, 1
      %p61 = scmp.eq.s32.totalorder %s23, 1
      %p62 = scmp.ne.s32.totalorder %s57, %s59
      %p63 = scmp.eq.s32.totalorder %s23, 0
      %p64 = por %p62, %p63
      %p65 = scmp.ne.s32.totalorder %s57, %s59
      %p66 = scmp.eq.s32.totalorder %s28, 1
      %p67 = por %p65, %p66
      %p68 = scmp.ne.s32.totalorder %s59, %s60
      %p69 = scmp.eq.s32.totalorder %s28, 0
      %p70 = por %p68, %p69
      %p71 = scmp.ne.s32.totalorder %s59, %s60
      %p72 = scmp.eq.s32.totalorder %s29, 1
      %p73 = por %p71, %p72
      %p75 = scmp.ne.s32.totalorder %s60, %s74
      %p76 = scmp.eq.s32.totalorder %s29, 0
      %p77 = por %p75, %p76
      %s79 = sadd.s32 %s78, 1
      %p82 = scmp.eq.s32.totalorder %s23, 1
      %p83 = scmp.ne.s32.totalorder %s78, %s80
      %p84 = scmp.eq.s32.totalorder %s23, 0
      %p85 = por %p83, %p84
      %p86 = scmp.ne.s32.totalorder %s78, %s80
      %p87 = scmp.eq.s32.totalorder %s28, 1
      %p88 = por %p86, %p87
      %p89 = scmp.ne.s32.totalorder %s80, %s81
      %p90 = scmp.eq.s32.totalorder %s28, 0
      %p91 = por %p89, %p90
      %p92 = scmp.ne.s32.totalorder %s80, %s81
      %p93 = scmp.eq.s32.totalorder %s29, 1
      %p94 = por %p92, %p93
      %p96 = scmp.ne.s32.totalorder %s81, %s95
      %p97 = scmp.eq.s32.totalorder %s29, 0
      %p98 = por %p96, %p97
      %s100 = sadd.s32 %s99, 1
      %p103 = scmp.eq.s32.totalorder %s23, 1
      %p104 = scmp.ne.s32.totalorder %s99, %s101
      %p105 = scmp.eq.s32.totalorder %s23, 0
      %p106 = por %p104, %p105
      %p107 = scmp.ne.s32.totalorder %s99, %s101
      %p108 = scmp.eq.s32.totalorder %s28, 1
      %p109 = por %p107, %p108
      %p110 = scmp.ne.s32.totalorder %s101, %s102
      %p111 = scmp.eq.s32.totalorder %s28, 0
      %p112 = por %p110, %p111
      %p113 = scmp.ne.s32.totalorder %s101, %s102
      %p114 = scmp.eq.s32.totalorder %s29, 1
      %p115 = por %p113, %p114
      %p117 = scmp.ne.s32.totalorder %s102, %s116
      %p118 = scmp.eq.s32.totalorder %s29, 0
      %p119 = por %p117, %p118
      %s121 = sadd.s32 %s120, 1
      %p124 = scmp.eq.s32.totalorder %s23, 1
      %p125 = scmp.ne.s32.totalorder %s120, %s122
      %p126 = scmp.eq.s32.totalorder %s23, 0
      %p127 = por %p125, %p126
      %p128 = scmp.ne.s32.totalorder %s120, %s122
      %p129 = scmp.eq.s32.totalorder %s28, 1
      %p130 = por %p128, %p129
      %p131 = scmp.ne.s32.totalorder %s122, %s123
      %p132 = scmp.eq.s32.totalorder %s28, 0
      %p133 = por %p131, %p132
      %p134 = scmp.ne.s32.totalorder %s122, %s123
      %p135 = scmp.eq.s32.totalorder %s29, 1
      %p136 = por %p134, %p135
      %p138 = scmp.ne.s32.totalorder %s123, %s137
      %p139 = scmp.eq.s32.totalorder %s29, 0
      %p140 = por %p138, %p139
      %s142 = sadd.s32 %s141, 1
      %p145 = scmp.eq.s32.totalorder %s23, 1
      %p146 = scmp.ne.s32.totalorder %s141, %s143
      %p147 = scmp.eq.s32.totalorder %s23, 0
      %p148 = por %p146, %p147
      %p149 = scmp.ne.s32.totalorder %s141, %s143
      %p150 = scmp.eq.s32.totalorder %s28, 1
      %p151 = por %p149, %p150
      %p152 = scmp.ne.s32.totalorder %s143, %s144
      %p153 = scmp.eq.s32.totalorder %s28, 0
      %p154 = por %p152, %p153
      %p155 = scmp.ne.s32.totalorder %s143, %s144
      %p156 = scmp.eq.s32.totalorder %s29, 1
      %p157 = por %p155, %p156
      %p159 = scmp.ne.s32.totalorder %s144, %s158
      %p160 = scmp.eq.s32.totalorder %s29, 0
      %p161 = por %p159, %p160
      %s163 = sadd.s32 %s162, 1
      %p166 = scmp.eq.s32.totalorder %s23, 1
      %p167 = scmp.ne.s32.totalorder %s162, %s164
      %p168 = scmp.eq.s32.totalorder %s23, 0
      %p169 = por %p167, %p168
      %p170 = scmp.ne.s32.totalorder %s162, %s164
      %p171 = scmp.eq.s32.totalorder %s28, 1
      %p172 = por %p170, %p171
      %p173 = scmp.ne.s32.totalorder %s164, %s165
      %p174 = scmp.eq.s32.totalorder %s28, 0
      %p175 = por %p173, %p174
      %p176 = scmp.ne.s32.totalorder %s164, %s165
      %p177 = scmp.eq.s32.totalorder %s29, 1
      %p178 = por %p176, %p177
      %p180 = scmp.ne.s32.totalorder %s165, %s179
      %p181 = scmp.eq.s32.totalorder %s29, 0
      %p182 = por %p180, %p181
      %s184 = sadd.s32 %s183, 1
      %p187 = scmp.eq.s32.totalorder %s23, 1
      %p188 = scmp.ne.s32.totalorder %s183, %s185
      %p189 = scmp.eq.s32.totalorder %s23, 0
      %p190 = por %p188, %p189
      %p191 = scmp.ne.s32.totalorder %s183, %s185
      %p192 = scmp.eq.s32.totalorder %s28, 1
      %p193 = por %p191, %p192
      %p194 = scmp.ne.s32.totalorder %s185, %s186
      %p195 = scmp.eq.s32.totalorder %s28, 0
      %p196 = por %p194, %p195
      %p197 = scmp.ne.s32.totalorder %s185, %s186
      %p198 = scmp.eq.s32.totalorder %s29, 1
      %p199 = por %p197, %p198
      %p201 = scmp.ne.s32.totalorder %s186, %s200
      %p202 = scmp.eq.s32.totalorder %s29, 0
      %p203 = por %p201, %p202
      %s205 = sadd.s32 %s204, 1
      %p208 = scmp.eq.s32.totalorder %s23, 1
      %p209 = scmp.ne.s32.totalorder %s204, %s206
      %p210 = scmp.eq.s32.totalorder %s23, 0
      %p211 = por %p209, %p210
      %p212 = scmp.ne.s32.totalorder %s204, %s206
      %p213 = scmp.eq.s32.totalorder %s28, 1
      %p214 = por %p212, %p213
      %p215 = scmp.ne.s32.totalorder %s206, %s207
      %p216 = scmp.eq.s32.totalorder %s28, 0
      %p217 = por %p215, %p216
      %p218 = scmp.ne.s32.totalorder %s206, %s207
      %p219 = scmp.eq.s32.totalorder %s29, 1
      %p220 = por %p218, %p219
      %p222 = scmp.ne.s32.totalorder %s207, %s221
      %p223 = scmp.eq.s32.totalorder %s29, 0
      %p224 = por %p222, %p223
      %s225 = ssub.s32 %s23, %s30
      %p226 = scmp.eq.s32.totalorder %s225, 0
      %s228 = sadd.s32 %s227, 1
      %s229 = scalar_select %p226, %s227, %s228
      %p232 = pneg %p226
      %p233 = scmp.eq.s32.totalorder %s23, 1
      %p234 = por %p232, %p233
      %p235 = scmp.ne.s32.totalorder %s227, %s230
      %p236 = scmp.eq.s32.totalorder %s23, 0
      %p237 = por %p235, %p236
      %p238 = scmp.ne.s32.totalorder %s227, %s230
      %p239 = scmp.eq.s32.totalorder %s28, 1
      %p240 = por %p238, %p239
      %p241 = scmp.ne.s32.totalorder %s230, %s231
      %p242 = scmp.eq.s32.totalorder %s28, 0
      %p243 = por %p241, %p242
      %p244 = scmp.ne.s32.totalorder %s230, %s231
      %p245 = scmp.eq.s32.totalorder %s29, 1
      %p246 = por %p244, %p245
      %p248 = scmp.ne.s32.totalorder %s231, %s247
      %p249 = scmp.eq.s32.totalorder %s29, 0
      %p250 = por %p248, %p249
      %s251 = ssub.s32 %s23, %s30
      %p252 = scmp.eq.s32.totalorder %s251, 0
      %s254 = sadd.s32 %s253, 1
      %s255 = scalar_select %p252, %s253, %s254
      %p258 = pneg %p252
      %p259 = scmp.eq.s32.totalorder %s23, 1
      %p260 = por %p258, %p259
      %p261 = scmp.ne.s32.totalorder %s253, %s256
      %p262 = scmp.eq.s32.totalorder %s23, 0
      %p263 = por %p261, %p262
      %p264 = scmp.ne.s32.totalorder %s253, %s256
      %p265 = scmp.eq.s32.totalorder %s28, 1
      %p266 = por %p264, %p265
      %p267 = scmp.ne.s32.totalorder %s256, %s257
      %p268 = scmp.eq.s32.totalorder %s28, 0
      %p269 = por %p267, %p268
      %p270 = scmp.ne.s32.totalorder %s256, %s257
      %p271 = scmp.eq.s32.totalorder %s29, 1
      %p272 = por %p270, %p271
      %p274 = scmp.ne.s32.totalorder %s257, %s273
      %p275 = scmp.eq.s32.totalorder %s29, 0
      %p276 = por %p274, %p275
      %p277 = scmp.le.s32.totalorder 1, %s23
      %p278 = scmp.lt.s32.totalorder %s23, 3
      %p279 = pnand %p277, %p278
      %p280 = pneg %p279
      // Predicated region
      $region9: #{encoder_forward.1} parent=5 // pred_check
        _
      $region10: #{encoder_forward.1} parent=5 // pred_check_branch
        %282 = sbr.rel (%p279) target = $region12
      $region11: #{encoder_forward.1} parent=5 // pred_region
        %s283 = ssub.s32 %s23, 1
        // Predicated region
        $region13: #{encoder_forward.1} parent=11 // pred_check
          %p284 = pneg %p70
        $region14: #{encoder_forward.1} parent=11 // pred_check_branch
          %286 = sbr.rel (%p284) target = $region16
        $region15: #{encoder_forward.1} parent=11 // pred_region
          _
        $region16: #{encoder_forward.1} parent=11 // pred_fallthru
          _
        // Predicated region
        $region17: #{encoder_forward.1} parent=11 // pred_check
          %p287 = pneg %p91
        $region18: #{encoder_forward.1} parent=11 // pred_check_branch
          %289 = sbr.rel (%p287) target = $region20
        $region19: #{encoder_forward.1} parent=11 // pred_region
          _
        $region20: #{encoder_forward.1} parent=11 // pred_fallthru
          _
        // Predicated region
        $region21: #{encoder_forward.1} parent=11 // pred_check
          %p290 = pneg %p112
        $region22: #{encoder_forward.1} parent=11 // pred_check_branch
          %292 = sbr.rel (%p290) target = $region24
        $region23: #{encoder_forward.1} parent=11 // pred_region
          _
        $region24: #{encoder_forward.1} parent=11 // pred_fallthru
          _
        // Predicated region
        $region25: #{encoder_forward.1} parent=11 // pred_check
          %p293 = pneg %p133
        $region26: #{encoder_forward.1} parent=11 // pred_check_branch
          %295 = sbr.rel (%p293) target = $region28
        $region27: #{encoder_forward.1} parent=11 // pred_region
          _
        $region28: #{encoder_forward.1} parent=11 // pred_fallthru
          _
        // Predicated region
        $region29: #{encoder_forward.1} parent=11 // pred_check
          %p296 = pneg %p154
        $region30: #{encoder_forward.1} parent=11 // pred_check_branch
          %298 = sbr.rel (%p296) target = $region32
        $region31: #{encoder_forward.1} parent=11 // pred_region
          _
        $region32: #{encoder_forward.1} parent=11 // pred_fallthru
          _
        // Predicated region
        $region33: #{encoder_forward.1} parent=11 // pred_check
          %p299 = pneg %p175
        $region34: #{encoder_forward.1} parent=11 // pred_check_branch
          %301 = sbr.rel (%p299) target = $region36
        $region35: #{encoder_forward.1} parent=11 // pred_region
          _
        $region36: #{encoder_forward.1} parent=11 // pred_fallthru
          _
        // Predicated region
        $region37: #{encoder_forward.1} parent=11 // pred_check
          %p302 = pneg %p196
        $region38: #{encoder_forward.1} parent=11 // pred_check_branch
          %304 = sbr.rel (%p302) target = $region40
        $region39: #{encoder_forward.1} parent=11 // pred_region
          _
        $region40: #{encoder_forward.1} parent=11 // pred_fallthru
          _
        // Predicated region
        $region41: #{encoder_forward.1} parent=11 // pred_check
          %p305 = pneg %p217
        $region42: #{encoder_forward.1} parent=11 // pred_check_branch
          %307 = sbr.rel (%p305) target = $region44
        $region43: #{encoder_forward.1} parent=11 // pred_region
          _
        $region44: #{encoder_forward.1} parent=11 // pred_fallthru
          _
      $region12: #{encoder_forward.1} parent=5 // pred_fallthru
        _
      %p308 = scmp.lt.s32.totalorder %s23, 2
      // Predicated region
      $region45: #{encoder_forward.1} parent=5 // pred_check
        %p309 = pneg %p308
      $region46: #{encoder_forward.1} parent=5 // pred_check_branch
        %311 = sbr.rel (%p309) target = $region48
      $region47: #{encoder_forward.1} parent=5 // pred_region
        // Predicated region
        $region49: #{encoder_forward.1} parent=47 // pred_check
          %p312 = pneg %p43
        $region50: #{encoder_forward.1} parent=47 // pred_check_branch
          %314 = sbr.rel (%p312) target = $region52
        $region51: #{encoder_forward.1} parent=47 // pred_region
          %p315 = scmp.lt.s32.totalorder %s23, 1
          %s316 = scalar_select %p315, %s23, 1
          %s317 = smul.addr %s316, 8
          %s318 = scalar_lea.vmem %s0, %s317
        $region52: #{encoder_forward.1} parent=47 // pred_fallthru
          _
      $region48: #{encoder_forward.1} parent=5 // pred_fallthru
        _
      %p319 = scmp.le.s32.totalorder 1, %s23
      %p320 = scmp.lt.s32.totalorder %s23, 3
      %p321 = pnand %p319, %p320
      %p322 = pneg %p321
      // Predicated region
      $region53: #{encoder_forward.1} parent=5 // pred_check
        _
      $region54: #{encoder_forward.1} parent=5 // pred_check_branch
        %324 = sbr.rel (%p321) target = $region56
      $region55: #{encoder_forward.1} parent=5 // pred_region
        %s325 = ssub.s32 %s23, 1
        %p326 = scmp.lt.s32.totalorder %s28, 1
        %s327 = scalar_select %p326, %s28, 1
        %s328 = smul.addr %s327, 8
        %s329 = scalar_lea.vmem %s0, %s328
        %p330 = pneg %p49
        %p331 = pneg %p46
        %p332 = pneg %p70
        %p333 = pneg %p67
        %p334 = pneg %p91
        %p335 = pneg %p88
        %p336 = pneg %p112
        %p337 = pneg %p109
        %p338 = pneg %p133
        %p339 = pneg %p130
        %p340 = pneg %p154
        %p341 = pneg %p151
        %p342 = pneg %p175
        %p343 = pneg %p172
        %p344 = pneg %p196
        %p345 = pneg %p193
        %p346 = pneg %p217
        %p347 = pneg %p214
        %p348 = pneg %p243
        %p349 = pneg %p240
        %s350 = sand.u32 %s230, 1
        %s351 = scalar_lea.sflag [#allocation3], %s350
        %s352 = sand.u32 %s230, 1
        %s353 = smul.addr %s352, 8
        %s354 = scalar_lea.vmem [#allocation2], %s353
        %p355 = pneg %p269
        %p356 = pneg %p266
        %s357 = sand.u32 %s256, 1
        %s358 = scalar_lea.sflag [#allocation5], %s357
        %s359 = sand.u32 %s256, 1
        %s360 = smul.addr %s359, 8
        %s361 = scalar_lea.vmem [#allocation4], %s360
        %p362 = scmp.lt.s32.totalorder %s28, 1
        %s363 = scalar_select %p362, %s28, 1
        %s364 = smul.addr %s363, 8
        %s365 = scalar_lea.vmem %s0, %s364
        %v367 = vld [vmem:[%s365] sm:$0xff]
        %v368 = vpack.c.bf16 %v367, %v367
        %v369 = vld [vmem:[%s1] sm:$0xf]
        %v370 = vld [vmem:[%s1 + $0x4] sm:$0xf]
        %v371 = vld [vmem:[%s1 + $0x8] sm:$0xf]
        %v372 = vld [vmem:[%s1 + $0xc] sm:$0xf]
        %v373 = vld [vmem:[%s2] sm:$0x1]
        %v375 = vlaneseq
        %v376 = vshrl.u32 %v375, 7
        %v377 = vsub.s32 0, %v376
        %v378 = vrot.slane %v373, %v377
        %v384 = vunpack.c.l.b16 %v369
        %v385 = vunpack.c.l.b16 %v370
        %v386 = vunpack.c.l.b16 %v371
        %v387 = vunpack.c.l.b16 %v372
        %v388 = vpack.c.b16 %v385, %v384
        %v389 = vpack.c.b16 %v387, %v386
        %vm392 = vcmask 261120
        %v394 = vsel %vm392, %v368, 0
        %396 = vmatprep.subr.bf16.mxu0 0
        %397 = vmatpush1.bf16.msra.mxu0 0
        %398 = vmatprep.subr.bf16.mxu0 0
        %399 = vmatpush1.bf16.msra.mxu0 0
        %400 = vmatprep.subr.bf16.mxu0 0
        %401 = vmatpush1.bf16.msra.mxu0 0
        %402 = vmatprep.subr.bf16.mxu0 0
        %403 = vmatpush1.bf16.msra.mxu0 0
        %404 = vmatprep.subr.bf16.mxu0 0
        %405 = vmatpush1.bf16.msra.mxu0 0
        %406 = vmatprep.subr.bf16.mxu0 0
        %407 = vmatpush1.bf16.msra.mxu0 0
        %408 = vmatprep.subr.bf16.mxu0 0
        %409 = vmatpush1.bf16.msra.mxu0 %v389
        %410 = vmatprep.subr.bf16.mxu0 0
        %411 = vmatpush1.bf16.msra.mxu0 %v388
        %412 = vmatprep.subr.bf16.mxu0 0
        %413 = vmatpush2.bf16.msra.mxu0 0
        %414 = vmatprep.subr.bf16.mxu0 0
        %415 = vmatpush2.bf16.msra.mxu0 0
        %416 = vmatprep.subr.bf16.mxu0 0
        %417 = vmatpush2.bf16.msra.mxu0 0
        %418 = vmatprep.subr.bf16.mxu0 0
        %419 = vmatpush2.bf16.msra.mxu0 0
        %420 = vmatprep.subr.bf16.mxu0 0
        %421 = vmatpush2.bf16.msra.mxu0 0
        %422 = vmatprep.subr.bf16.mxu0 0
        %423 = vmatpush2.bf16.msra.mxu0 0
        %424 = vmatprep.subr.bf16.mxu0 0
        %425 = vmatpush2.bf16.msra.mxu0 0
        %426 = vmatprep.subr.bf16.mxu0 0
        %427 = vmatpush2.bf16.msra.mxu0 0
        %428 = vmatprep.mubr.bf16.mxu0 0
        %429 = vmatmul.mubr.bf16.gmra.mxu0 %v394
        %v430 = vpop.f32.mrf.mxu0
        %v431 = vadd.f32 %v378, %v430
        %v432 = vpop.f32.mrf.mxu0
        %v433 = vpop.f32.mrf.mxu0
        %v434 = vpop.f32.mrf.mxu0
        %435 = vdwg.mxu0
        %v437 = vrot.slane %v431, 7
        %vm439 = vcmask 1040384
        %v440 = vsel %vm439, 0.0, %v437
        %v441 = vrot.slane %v431, 1
        %vm443 = vcmask 1046528
        %v444 = vsel %vm443, %v441, 0.0
        %v445 = vpack.c.bf16 %v440, %v440
        %v446 = vpack.c.bf16 %v431, %v431
        %v447 = vpack.c.bf16 %v444, %v444
        %v448 = vld [vmem:[%s5] sm:$0x1]
        %v449 = vld [vmem:[%s6] sm:$0x1]
        %v450 = vld [vmem:[%s3] sm:$0xf]
        %v451 = vld [vmem:[%s3 + $0x4] sm:$0xf]
        %v452 = vld [vmem:[%s3 + $0x8] sm:$0xf]
        %v453 = vld [vmem:[%s3 + $0xc] sm:$0xf]
        %v458 = vunpack.c.l.b16 %v450
        %v459 = vunpack.c.l.b16 %v451
        %v460 = vunpack.c.l.b16 %v452
        %v461 = vunpack.c.l.b16 %v453
        %v462 = vpack.c.b16 %v459, %v458
        %v463 = vpack.c.b16 %v461, %v460
        %v467 = vsel %vm392, %v445, 0
        %469 = vmatprep.subr.bf16.mxu0 0
        %470 = vmatpush1.bf16.msra.mxu0 0
        %471 = vmatprep.subr.bf16.mxu0 0
        %472 = vmatpush1.bf16.msra.mxu0 0
        %473 = vmatprep.subr.bf16.mxu0 0
        %474 = vmatpush1.bf16.msra.mxu0 0
        %475 = vmatprep.subr.bf16.mxu0 0
        %476 = vmatpush1.bf16.msra.mxu0 0
        %477 = vmatprep.subr.bf16.mxu0 0
        %478 = vmatpush1.bf16.msra.mxu0 0
        %479 = vmatprep.subr.bf16.mxu0 0
        %480 = vmatpush1.bf16.msra.mxu0 0
        %481 = vmatprep.subr.bf16.mxu0 0
        %482 = vmatpush1.bf16.msra.mxu0 %v463
        %483 = vmatprep.subr.bf16.mxu0 0
        %484 = vmatpush1.bf16.msra.mxu0 %v462
        %485 = vmatprep.subr.bf16.mxu0 0
        %486 = vmatpush2.bf16.msra.mxu0 0
        %487 = vmatprep.subr.bf16.mxu0 0
        %488 = vmatpush2.bf16.msra.mxu0 0
        %489 = vmatprep.subr.bf16.mxu0 0
        %490 = vmatpush2.bf16.msra.mxu0 0
        %491 = vmatprep.subr.bf16.mxu0 0
        %492 = vmatpush2.bf16.msra.mxu0 0
        %493 = vmatprep.subr.bf16.mxu0 0
        %494 = vmatpush2.bf16.msra.mxu0 0
        %495 = vmatprep.subr.bf16.mxu0 0
        %496 = vmatpush2.bf16.msra.mxu0 0
        %497 = vmatprep.subr.bf16.mxu0 0
        %498 = vmatpush2.bf16.msra.mxu0 0
        %499 = vmatprep.subr.bf16.mxu0 0
        %500 = vmatpush2.bf16.msra.mxu0 0
        %501 = vmatprep.mubr.bf16.mxu0 0
        %502 = vmatmul.mubr.bf16.gmra.mxu0 %v467
        %v503 = vpop.f32.mrf.mxu0
        %v504 = vadd.f32 0.0, %v503
        %v505 = vpop.f32.mrf.mxu0
        %v506 = vpop.f32.mrf.mxu0
        %v507 = vpop.f32.mrf.mxu0
        %508 = vdwg.mxu0
        %v510 = vlaneseq
        %v511 = vshrl.u32 %v510, 7
        %v512 = vsub.s32 0, %v511
        %v513 = vrot.slane %v448, %v512
        %v515 = vadd.f32 %v513, %v504
        %v516 = vld [vmem:[%s4] sm:$0xf]
        %v517 = vld [vmem:[%s4 + $0x4] sm:$0xf]
        %v518 = vld [vmem:[%s4 + $0x8] sm:$0xf]
        %v519 = vld [vmem:[%s4 + $0xc] sm:$0xf]
        %v524 = vunpack.c.l.b16 %v516
        %v525 = vunpack.c.l.b16 %v517
        %v526 = vunpack.c.l.b16 %v518
        %v527 = vunpack.c.l.b16 %v519
        %v528 = vpack.c.b16 %v525, %v524
        %v529 = vpack.c.b16 %v527, %v526
        %532 = vmatprep.subr.bf16.mxu0 0
        %533 = vmatpush1.bf16.msra.mxu0 0
        %534 = vmatprep.subr.bf16.mxu0 0
        %535 = vmatpush1.bf16.msra.mxu0 0
        %536 = vmatprep.subr.bf16.mxu0 0
        %537 = vmatpush1.bf16.msra.mxu0 0
        %538 = vmatprep.subr.bf16.mxu0 0
        %539 = vmatpush1.bf16.msra.mxu0 0
        %540 = vmatprep.subr.bf16.mxu0 0
        %541 = vmatpush1.bf16.msra.mxu0 0
        %542 = vmatprep.subr.bf16.mxu0 0
        %543 = vmatpush1.bf16.msra.mxu0 0
        %544 = vmatprep.subr.bf16.mxu0 0
        %545 = vmatpush1.bf16.msra.mxu0 %v529
        %546 = vmatprep.subr.bf16.mxu0 0
        %547 = vmatpush1.bf16.msra.mxu0 %v528
        %548 = vmatprep.subr.bf16.mxu0 0
        %549 = vmatpush2.bf16.msra.mxu0 0
        %550 = vmatprep.subr.bf16.mxu0 0
        %551 = vmatpush2.bf16.msra.mxu0 0
        %552 = vmatprep.subr.bf16.mxu0 0
        %553 = vmatpush2.bf16.msra.mxu0 0
        %554 = vmatprep.subr.bf16.mxu0 0
        %555 = vmatpush2.bf16.msra.mxu0 0
        %556 = vmatprep.subr.bf16.mxu0 0
        %557 = vmatpush2.bf16.msra.mxu0 0
        %558 = vmatprep.subr.bf16.mxu0 0
        %559 = vmatpush2.bf16.msra.mxu0 0
        %560 = vmatprep.subr.bf16.mxu0 0
        %561 = vmatpush2.bf16.msra.mxu0 0
        %562 = vmatprep.subr.bf16.mxu0 0
        %563 = vmatpush2.bf16.msra.mxu0 0
        %564 = vmatprep.mubr.bf16.mxu0 0
        %565 = vmatmul.mubr.bf16.gmra.mxu0 %v467
        %v566 = vpop.f32.mrf.mxu0
        %v567 = vadd.f32 0.0, %v566
        %v568 = vpop.f32.mrf.mxu0
        %v569 = vpop.f32.mrf.mxu0
        %v570 = vpop.f32.mrf.mxu0
        %571 = vdwg.mxu0
        %v573 = vlaneseq
        %v574 = vshrl.u32 %v573, 7
        %v575 = vsub.s32 0, %v574
        %v576 = vrot.slane %v449, %v575
        %v578 = vadd.f32 %v576, %v567
        %s579 = scalar_lea.vmem %s3, 16
        %v580 = vld [vmem:[%s579] sm:$0xf]
        %v581 = vld [vmem:[%s579 + $0x4] sm:$0xf]
        %v582 = vld [vmem:[%s579 + $0x8] sm:$0xf]
        %v583 = vld [vmem:[%s579 + $0xc] sm:$0xf]
        %v588 = vunpack.c.l.b16 %v580
        %v589 = vunpack.c.l.b16 %v581
        %v590 = vunpack.c.l.b16 %v582
        %v591 = vunpack.c.l.b16 %v583
        %v592 = vpack.c.b16 %v589, %v588
        %v593 = vpack.c.b16 %v591, %v590
        %v597 = vsel %vm392, %v446, 0
        %599 = vmatprep.subr.bf16.mxu0 0
        %600 = vmatpush1.bf16.msra.mxu0 0
        %601 = vmatprep.subr.bf16.mxu0 0
        %602 = vmatpush1.bf16.msra.mxu0 0
        %603 = vmatprep.subr.bf16.mxu0 0
        %604 = vmatpush1.bf16.msra.mxu0 0
        %605 = vmatprep.subr.bf16.mxu0 0
        %606 = vmatpush1.bf16.msra.mxu0 0
        %607 = vmatprep.subr.bf16.mxu0 0
        %608 = vmatpush1.bf16.msra.mxu0 0
        %609 = vmatprep.subr.bf16.mxu0 0
        %610 = vmatpush1.bf16.msra.mxu0 0
        %611 = vmatprep.subr.bf16.mxu0 0
        %612 = vmatpush1.bf16.msra.mxu0 %v593
        %613 = vmatprep.subr.bf16.mxu0 0
        %614 = vmatpush1.bf16.msra.mxu0 %v592
        %615 = vmatprep.subr.bf16.mxu0 0
        %616 = vmatpush2.bf16.msra.mxu0 0
        %617 = vmatprep.subr.bf16.mxu0 0
        %618 = vmatpush2.bf16.msra.mxu0 0
        %619 = vmatprep.subr.bf16.mxu0 0
        %620 = vmatpush2.bf16.msra.mxu0 0
        %621 = vmatprep.subr.bf16.mxu0 0
        %622 = vmatpush2.bf16.msra.mxu0 0
        %623 = vmatprep.subr.bf16.mxu0 0
        %624 = vmatpush2.bf16.msra.mxu0 0
        %625 = vmatprep.subr.bf16.mxu0 0
        %626 = vmatpush2.bf16.msra.mxu0 0
        %627 = vmatprep.subr.bf16.mxu0 0
        %628 = vmatpush2.bf16.msra.mxu0 0
        %629 = vmatprep.subr.bf16.mxu0 0
        %630 = vmatpush2.bf16.msra.mxu0 0
        %631 = vmatprep.mubr.bf16.mxu0 0
        %632 = vmatmul.mubr.bf16.gmra.mxu0 %v597
        %v633 = vpop.f32.mrf.mxu0
        %v634 = vadd.f32 0.0, %v633
        %v635 = vpop.f32.mrf.mxu0
        %v636 = vpop.f32.mrf.mxu0
        %v637 = vpop.f32.mrf.mxu0
        %638 = vdwg.mxu0
        %v639 = vadd.f32 %v515, %v634
        %s640 = scalar_lea.vmem %s4, 16
        %v641 = vld [vmem:[%s640] sm:$0xf]
        %v642 = vld [vmem:[%s640 + $0x4] sm:$0xf]
        %v643 = vld [vmem:[%s640 + $0x8] sm:$0xf]
        %v644 = vld [vmem:[%s640 + $0xc] sm:$0xf]
        %v649 = vunpack.c.l.b16 %v641
        %v650 = vunpack.c.l.b16 %v642
        %v651 = vunpack.c.l.b16 %v643
        %v652 = vunpack.c.l.b16 %v644
        %v653 = vpack.c.b16 %v650, %v649
        %v654 = vpack.c.b16 %v652, %v651
        %657 = vmatprep.subr.bf16.mxu0 0
        %658 = vmatpush1.bf16.msra.mxu0 0
        %659 = vmatprep.subr.bf16.mxu0 0
        %660 = vmatpush1.bf16.msra.mxu0 0
        %661 = vmatprep.subr.bf16.mxu0 0
        %662 = vmatpush1.bf16.msra.mxu0 0
        %663 = vmatprep.subr.bf16.mxu0 0
        %664 = vmatpush1.bf16.msra.mxu0 0
        %665 = vmatprep.subr.bf16.mxu0 0
        %666 = vmatpush1.bf16.msra.mxu0 0
        %667 = vmatprep.subr.bf16.mxu0 0
        %668 = vmatpush1.bf16.msra.mxu0 0
        %669 = vmatprep.subr.bf16.mxu0 0
        %670 = vmatpush1.bf16.msra.mxu0 %v654
        %671 = vmatprep.subr.bf16.mxu0 0
        %672 = vmatpush1.bf16.msra.mxu0 %v653
        %673 = vmatprep.subr.bf16.mxu0 0
        %674 = vmatpush2.bf16.msra.mxu0 0
        %675 = vmatprep.subr.bf16.mxu0 0
        %676 = vmatpush2.bf16.msra.mxu0 0
        %677 = vmatprep.subr.bf16.mxu0 0
        %678 = vmatpush2.bf16.msra.mxu0 0
        %679 = vmatprep.subr.bf16.mxu0 0
        %680 = vmatpush2.bf16.msra.mxu0 0
        %681 = vmatprep.subr.bf16.mxu0 0
        %682 = vmatpush2.bf16.msra.mxu0 0
        %683 = vmatprep.subr.bf16.mxu0 0
        %684 = vmatpush2.bf16.msra.mxu0 0
        %685 = vmatprep.subr.bf16.mxu0 0
        %686 = vmatpush2.bf16.msra.mxu0 0
        %687 = vmatprep.subr.bf16.mxu0 0
        %688 = vmatpush2.bf16.msra.mxu0 0
        %689 = vmatprep.mubr.bf16.mxu0 0
        %690 = vmatmul.mubr.bf16.gmra.mxu0 %v597
        %v691 = vpop.f32.mrf.mxu0
        %v692 = vadd.f32 0.0, %v691
        %v693 = vpop.f32.mrf.mxu0
        %v694 = vpop.f32.mrf.mxu0
        %v695 = vpop.f32.mrf.mxu0
        %696 = vdwg.mxu0
        %v697 = vadd.f32 %v578, %v692
        %s698 = scalar_lea.vmem %s3, 32
        %v699 = vld [vmem:[%s698] sm:$0xf]
        %v700 = vld [vmem:[%s698 + $0x4] sm:$0xf]
        %v701 = vld [vmem:[%s698 + $0x8] sm:$0xf]
        %v702 = vld [vmem:[%s698 + $0xc] sm:$0xf]
        %v707 = vunpack.c.l.b16 %v699
        %v708 = vunpack.c.l.b16 %v700
        %v709 = vunpack.c.l.b16 %v701
        %v710 = vunpack.c.l.b16 %v702
        %v711 = vpack.c.b16 %v708, %v707
        %v712 = vpack.c.b16 %v710, %v709
        %v716 = vsel %vm392, %v447, 0
        %718 = vmatprep.subr.bf16.mxu0 0
        %719 = vmatpush1.bf16.msra.mxu0 0
        %720 = vmatprep.subr.bf16.mxu0 0
        %721 = vmatpush1.bf16.msra.mxu0 0
        %722 = vmatprep.subr.bf16.mxu0 0
        %723 = vmatpush1.bf16.msra.mxu0 0
        %724 = vmatprep.subr.bf16.mxu0 0
        %725 = vmatpush1.bf16.msra.mxu0 0
        %726 = vmatprep.subr.bf16.mxu0 0
        %727 = vmatpush1.bf16.msra.mxu0 0
        %728 = vmatprep.subr.bf16.mxu0 0
        %729 = vmatpush1.bf16.msra.mxu0 0
        %730 = vmatprep.subr.bf16.mxu0 0
        %731 = vmatpush1.bf16.msra.mxu0 %v712
        %732 = vmatprep.subr.bf16.mxu0 0
        %733 = vmatpush1.bf16.msra.mxu0 %v711
        %734 = vmatprep.subr.bf16.mxu0 0
        %735 = vmatpush2.bf16.msra.mxu0 0
        %736 = vmatprep.subr.bf16.mxu0 0
        %737 = vmatpush2.bf16.msra.mxu0 0
        %738 = vmatprep.subr.bf16.mxu0 0
        %739 = vmatpush2.bf16.msra.mxu0 0
        %740 = vmatprep.subr.bf16.mxu0 0
        %741 = vmatpush2.bf16.msra.mxu0 0
        %742 = vmatprep.subr.bf16.mxu0 0
        %743 = vmatpush2.bf16.msra.mxu0 0
        %744 = vmatprep.subr.bf16.mxu0 0
        %745 = vmatpush2.bf16.msra.mxu0 0
        %746 = vmatprep.subr.bf16.mxu0 0
        %747 = vmatpush2.bf16.msra.mxu0 0
        %748 = vmatprep.subr.bf16.mxu0 0
        %749 = vmatpush2.bf16.msra.mxu0 0
        %750 = vmatprep.mubr.bf16.mxu0 0
        %751 = vmatmul.mubr.bf16.gmra.mxu0 %v716
        %v752 = vpop.f32.mrf.mxu0
        %v753 = vadd.f32 0.0, %v752
        %v754 = vpop.f32.mrf.mxu0
        %v755 = vpop.f32.mrf.mxu0
        %v756 = vpop.f32.mrf.mxu0
        %757 = vdwg.mxu0
        %v758 = vadd.f32 %v639, %v753
        %s759 = scalar_lea.vmem %s4, 32
        %v760 = vld [vmem:[%s759] sm:$0xf]
        %v761 = vld [vmem:[%s759 + $0x4] sm:$0xf]
        %v762 = vld [vmem:[%s759 + $0x8] sm:$0xf]
        %v763 = vld [vmem:[%s759 + $0xc] sm:$0xf]
        %v768 = vunpack.c.l.b16 %v760
        %v769 = vunpack.c.l.b16 %v761
        %v770 = vunpack.c.l.b16 %v762
        %v771 = vunpack.c.l.b16 %v763
        %v772 = vpack.c.b16 %v769, %v768
        %v773 = vpack.c.b16 %v771, %v770
        %776 = vmatprep.subr.bf16.mxu0 0
        %777 = vmatpush1.bf16.msra.mxu0 0
        %778 = vmatprep.subr.bf16.mxu0 0
        %779 = vmatpush1.bf16.msra.mxu0 0
        %780 = vmatprep.subr.bf16.mxu0 0
        %781 = vmatpush1.bf16.msra.mxu0 0
        %782 = vmatprep.subr.bf16.mxu0 0
        %783 = vmatpush1.bf16.msra.mxu0 0
        %784 = vmatprep.subr.bf16.mxu0 0
        %785 = vmatpush1.bf16.msra.mxu0 0
        %786 = vmatprep.subr.bf16.mxu0 0
        %787 = vmatpush1.bf16.msra.mxu0 0
        %788 = vmatprep.subr.bf16.mxu0 0
        %789 = vmatpush1.bf16.msra.mxu0 %v773
        %790 = vmatprep.subr.bf16.mxu0 0
        %791 = vmatpush1.bf16.msra.mxu0 %v772
        %792 = vmatprep.subr.bf16.mxu0 0
        %793 = vmatpush2.bf16.msra.mxu0 0
        %794 = vmatprep.subr.bf16.mxu0 0
        %795 = vmatpush2.bf16.msra.mxu0 0
        %796 = vmatprep.subr.bf16.mxu0 0
        %797 = vmatpush2.bf16.msra.mxu0 0
        %798 = vmatprep.subr.bf16.mxu0 0
        %799 = vmatpush2.bf16.msra.mxu0 0
        %800 = vmatprep.subr.bf16.mxu0 0
        %801 = vmatpush2.bf16.msra.mxu0 0
        %802 = vmatprep.subr.bf16.mxu0 0
        %803 = vmatpush2.bf16.msra.mxu0 0
        %804 = vmatprep.subr.bf16.mxu0 0
        %805 = vmatpush2.bf16.msra.mxu0 0
        %806 = vmatprep.subr.bf16.mxu0 0
        %807 = vmatpush2.bf16.msra.mxu0 0
        %808 = vmatprep.mubr.bf16.mxu0 0
        %809 = vmatmul.mubr.bf16.gmra.mxu0 %v716
        %v810 = vpop.f32.mrf.mxu0
        %v811 = vadd.f32 0.0, %v810
        %v812 = vpop.f32.mrf.mxu0
        %v813 = vpop.f32.mrf.mxu0
        %v814 = vpop.f32.mrf.mxu0
        %815 = vdwg.mxu0
        %v816 = vadd.f32 %v697, %v811
        %v817 = vxor.u32 %v816, 2147483648
        %v818 = vmul.f32 %v817, 1.442695
        %v819 = vpow.pop %v818
        %v820 = vadd.f32 %v819, 1.0
        %v821 = vrcp.pop %v820
        %v822 = vmul.f32 1.0, %v821
        %v823 = vmul.f32 %v758, %v822
        %v824 = vadd.f32 %v823, %v431
        %v825 = vmul.f32 %v824, 0.70710677
        %v827 = vrot.slane %v825, 7
        %v829 = vsel %vm439, 0.0, %v827
        %v830 = vrot.slane %v825, 1
        %v832 = vsel %vm443, %v830, 0.0
        %v833 = vpack.c.bf16 %v829, %v829
        %v834 = vpack.c.bf16 %v825, %v825
        %v835 = vpack.c.bf16 %v832, %v832
        %s836 = scalar_lea.vmem %s5, 1
        %v837 = vld [vmem:[%s836] sm:$0x1]
        %s838 = scalar_lea.vmem %s6, 1
        %v839 = vld [vmem:[%s838] sm:$0x1]
        %s840 = scalar_lea.vmem %s3, 48
        %v841 = vld [vmem:[%s840] sm:$0xf]
        %v842 = vld [vmem:[%s840 + $0x4] sm:$0xf]
        %v843 = vld [vmem:[%s840 + $0x8] sm:$0xf]
        %v844 = vld [vmem:[%s840 + $0xc] sm:$0xf]
        %v849 = vunpack.c.l.b16 %v841
        %v850 = vunpack.c.l.b16 %v842
        %v851 = vunpack.c.l.b16 %v843
        %v852 = vunpack.c.l.b16 %v844
        %v853 = vpack.c.b16 %v850, %v849
        %v854 = vpack.c.b16 %v852, %v851
        %v858 = vsel %vm392, %v833, 0
        %860 = vmatprep.subr.bf16.mxu0 0
        %861 = vmatpush1.bf16.msra.mxu0 0
        %862 = vmatprep.subr.bf16.mxu0 0
        %863 = vmatpush1.bf16.msra.mxu0 0
        %864 = vmatprep.subr.bf16.mxu0 0
        %865 = vmatpush1.bf16.msra.mxu0 0
        %866 = vmatprep.subr.bf16.mxu0 0
        %867 = vmatpush1.bf16.msra.mxu0 0
        %868 = vmatprep.subr.bf16.mxu0 0
        %869 = vmatpush1.bf16.msra.mxu0 0
        %870 = vmatprep.subr.bf16.mxu0 0
        %871 = vmatpush1.bf16.msra.mxu0 0
        %872 = vmatprep.subr.bf16.mxu0 0
        %873 = vmatpush1.bf16.msra.mxu0 %v854
        %874 = vmatprep.subr.bf16.mxu0 0
        %875 = vmatpush1.bf16.msra.mxu0 %v853
        %876 = vmatprep.subr.bf16.mxu0 0
        %877 = vmatpush2.bf16.msra.mxu0 0
        %878 = vmatprep.subr.bf16.mxu0 0
        %879 = vmatpush2.bf16.msra.mxu0 0
        %880 = vmatprep.subr.bf16.mxu0 0
        %881 = vmatpush2.bf16.msra.mxu0 0
        %882 = vmatprep.subr.bf16.mxu0 0
        %883 = vmatpush2.bf16.msra.mxu0 0
        %884 = vmatprep.subr.bf16.mxu0 0
        %885 = vmatpush2.bf16.msra.mxu0 0
        %886 = vmatprep.subr.bf16.mxu0 0
        %887 = vmatpush2.bf16.msra.mxu0 0
        %888 = vmatprep.subr.bf16.mxu0 0
        %889 = vmatpush2.bf16.msra.mxu0 0
        %890 = vmatprep.subr.bf16.mxu0 0
        %891 = vmatpush2.bf16.msra.mxu0 0
        %892 = vmatprep.mubr.bf16.mxu0 0
        %893 = vmatmul.mubr.bf16.gmra.mxu0 %v858
        %v894 = vpop.f32.mrf.mxu0
        %v895 = vadd.f32 0.0, %v894
        %v896 = vpop.f32.mrf.mxu0
        %v897 = vpop.f32.mrf.mxu0
        %v898 = vpop.f32.mrf.mxu0
        %899 = vdwg.mxu0
        %v901 = vlaneseq
        %v902 = vshrl.u32 %v901, 7
        %v903 = vsub.s32 0, %v902
        %v904 = vrot.slane %v837, %v903
        %v906 = vadd.f32 %v904, %v895
        %s907 = scalar_lea.vmem %s4, 48
        %v908 = vld [vmem:[%s907] sm:$0xf]
        %v909 = vld [vmem:[%s907 + $0x4] sm:$0xf]
        %v910 = vld [vmem:[%s907 + $0x8] sm:$0xf]
        %v911 = vld [vmem:[%s907 + $0xc] sm:$0xf]
        %v916 = vunpack.c.l.b16 %v908
        %v917 = vunpack.c.l.b16 %v909
        %v918 = vunpack.c.l.b16 %v910
        %v919 = vunpack.c.l.b16 %v911
        %v920 = vpack.c.b16 %v917, %v916
        %v921 = vpack.c.b16 %v919, %v918
        %924 = vmatprep.subr.bf16.mxu0 0
        %925 = vmatpush1.bf16.msra.mxu0 0
        %926 = vmatprep.subr.bf16.mxu0 0
        %927 = vmatpush1.bf16.msra.mxu0 0
        %928 = vmatprep.subr.bf16.mxu0 0
        %929 = vmatpush1.bf16.msra.mxu0 0
        %930 = vmatprep.subr.bf16.mxu0 0
        %931 = vmatpush1.bf16.msra.mxu0 0
        %932 = vmatprep.subr.bf16.mxu0 0
        %933 = vmatpush1.bf16.msra.mxu0 0
        %934 = vmatprep.subr.bf16.mxu0 0
        %935 = vmatpush1.bf16.msra.mxu0 0
        %936 = vmatprep.subr.bf16.mxu0 0
        %937 = vmatpush1.bf16.msra.mxu0 %v921
        %938 = vmatprep.subr.bf16.mxu0 0
        %939 = vmatpush1.bf16.msra.mxu0 %v920
        %940 = vmatprep.subr.bf16.mxu0 0
        %941 = vmatpush2.bf16.msra.mxu0 0
        %942 = vmatprep.subr.bf16.mxu0 0
        %943 = vmatpush2.bf16.msra.mxu0 0
        %944 = vmatprep.subr.bf16.mxu0 0
        %945 = vmatpush2.bf16.msra.mxu0 0
        %946 = vmatprep.subr.bf16.mxu0 0
        %947 = vmatpush2.bf16.msra.mxu0 0
        %948 = vmatprep.subr.bf16.mxu0 0
        %949 = vmatpush2.bf16.msra.mxu0 0
        %950 = vmatprep.subr.bf16.mxu0 0
        %951 = vmatpush2.bf16.msra.mxu0 0
        %952 = vmatprep.subr.bf16.mxu0 0
        %953 = vmatpush2.bf16.msra.mxu0 0
        %954 = vmatprep.subr.bf16.mxu0 0
        %955 = vmatpush2.bf16.msra.mxu0 0
        %956 = vmatprep.mubr.bf16.mxu0 0
        %957 = vmatmul.mubr.bf16.gmra.mxu0 %v858
        %v958 = vpop.f32.mrf.mxu0
        %v959 = vadd.f32 0.0, %v958
        %v960 = vpop.f32.mrf.mxu0
        %v961 = vpop.f32.mrf.mxu0
        %v962 = vpop.f32.mrf.mxu0
        %963 = vdwg.mxu0
        %v965 = vlaneseq
        %v966 = vshrl.u32 %v965, 7
        %v967 = vsub.s32 0, %v966
        %v968 = vrot.slane %v839, %v967
        %v970 = vadd.f32 %v968, %v959
        %s971 = scalar_lea.vmem %s3, 64
        %v972 = vld [vmem:[%s971] sm:$0xf]
        %v973 = vld [vmem:[%s971 + $0x4] sm:$0xf]
        %v974 = vld [vmem:[%s971 + $0x8] sm:$0xf]
        %v975 = vld [vmem:[%s971 + $0xc] sm:$0xf]
        %v980 = vunpack.c.l.b16 %v972
        %v981 = vunpack.c.l.b16 %v973
        %v982 = vunpack.c.l.b16 %v974
        %v983 = vunpack.c.l.b16 %v975
        %v984 = vpack.c.b16 %v981, %v980
        %v985 = vpack.c.b16 %v983, %v982
        %v989 = vsel %vm392, %v834, 0
        %991 = vmatprep.subr.bf16.mxu0 0
        %992 = vmatpush1.bf16.msra.mxu0 0
        %993 = vmatprep.subr.bf16.mxu0 0
        %994 = vmatpush1.bf16.msra.mxu0 0
        %995 = vmatprep.subr.bf16.mxu0 0
        %996 = vmatpush1.bf16.msra.mxu0 0
        %997 = vmatprep.subr.bf16.mxu0 0
        %998 = vmatpush1.bf16.msra.mxu0 0
        %999 = vmatprep.subr.bf16.mxu0 0
        %1000 = vmatpush1.bf16.msra.mxu0 0
        %1001 = vmatprep.subr.bf16.mxu0 0
        %1002 = vmatpush1.bf16.msra.mxu0 0
        %1003 = vmatprep.subr.bf16.mxu0 0
        %1004 = vmatpush1.bf16.msra.mxu0 %v985
        %1005 = vmatprep.subr.bf16.mxu0 0
        %1006 = vmatpush1.bf16.msra.mxu0 %v984
        %1007 = vmatprep.subr.bf16.mxu0 0
        %1008 = vmatpush2.bf16.msra.mxu0 0
        %1009 = vmatprep.subr.bf16.mxu0 0
        %1010 = vmatpush2.bf16.msra.mxu0 0
        %1011 = vmatprep.subr.bf16.mxu0 0
        %1012 = vmatpush2.bf16.msra.mxu0 0
        %1013 = vmatprep.subr.bf16.mxu0 0
        %1014 = vmatpush2.bf16.msra.mxu0 0
        %1015 = vmatprep.subr.bf16.mxu0 0
        %1016 = vmatpush2.bf16.msra.mxu0 0
        %1017 = vmatprep.subr.bf16.mxu0 0
        %1018 = vmatpush2.bf16.msra.mxu0 0
        %1019 = vmatprep.subr.bf16.mxu0 0
        %1020 = vmatpush2.bf16.msra.mxu0 0
        %1021 = vmatprep.subr.bf16.mxu0 0
        %1022 = vmatpush2.bf16.msra.mxu0 0
        %1023 = vmatprep.mubr.bf16.mxu0 0
        %1024 = vmatmul.mubr.bf16.gmra.mxu0 %v989
        %v1025 = vpop.f32.mrf.mxu0
        %v1026 = vadd.f32 0.0, %v1025
        %v1027 = vpop.f32.mrf.mxu0
        %v1028 = vpop.f32.mrf.mxu0
        %v1029 = vpop.f32.mrf.mxu0
        %1030 = vdwg.mxu0
        %v1031 = vadd.f32 %v906, %v1026
        %s1032 = scalar_lea.vmem %s4, 64
        %v1033 = vld [vmem:[%s1032] sm:$0xf]
        %v1034 = vld [vmem:[%s1032 + $0x4] sm:$0xf]
        %v1035 = vld [vmem:[%s1032 + $0x8] sm:$0xf]
        %v1036 = vld [vmem:[%s1032 + $0xc] sm:$0xf]
        %v1041 = vunpack.c.l.b16 %v1033
        %v1042 = vunpack.c.l.b16 %v1034
        %v1043 = vunpack.c.l.b16 %v1035
        %v1044 = vunpack.c.l.b16 %v1036
        %v1045 = vpack.c.b16 %v1042, %v1041
        %v1046 = vpack.c.b16 %v1044, %v1043
        %1049 = vmatprep.subr.bf16.mxu0 0
        %1050 = vmatpush1.bf16.msra.mxu0 0
        %1051 = vmatprep.subr.bf16.mxu0 0
        %1052 = vmatpush1.bf16.msra.mxu0 0
        %1053 = vmatprep.subr.bf16.mxu0 0
        %1054 = vmatpush1.bf16.msra.mxu0 0
        %1055 = vmatprep.subr.bf16.mxu0 0
        %1056 = vmatpush1.bf16.msra.mxu0 0
        %1057 = vmatprep.subr.bf16.mxu0 0
        %1058 = vmatpush1.bf16.msra.mxu0 0
        %1059 = vmatprep.subr.bf16.mxu0 0
        %1060 = vmatpush1.bf16.msra.mxu0 0
        %1061 = vmatprep.subr.bf16.mxu0 0
        %1062 = vmatpush1.bf16.msra.mxu0 %v1046
        %1063 = vmatprep.subr.bf16.mxu0 0
        %1064 = vmatpush1.bf16.msra.mxu0 %v1045
        %1065 = vmatprep.subr.bf16.mxu0 0
        %1066 = vmatpush2.bf16.msra.mxu0 0
        %1067 = vmatprep.subr.bf16.mxu0 0
        %1068 = vmatpush2.bf16.msra.mxu0 0
        %1069 = vmatprep.subr.bf16.mxu0 0
        %1070 = vmatpush2.bf16.msra.mxu0 0
        %1071 = vmatprep.subr.bf16.mxu0 0
        %1072 = vmatpush2.bf16.msra.mxu0 0
        %1073 = vmatprep.subr.bf16.mxu0 0
        %1074 = vmatpush2.bf16.msra.mxu0 0
        %1075 = vmatprep.subr.bf16.mxu0 0
        %1076 = vmatpush2.bf16.msra.mxu0 0
        %1077 = vmatprep.subr.bf16.mxu0 0
        %1078 = vmatpush2.bf16.msra.mxu0 0
        %1079 = vmatprep.subr.bf16.mxu0 0
        %1080 = vmatpush2.bf16.msra.mxu0 0
        %1081 = vmatprep.mubr.bf16.mxu0 0
        %1082 = vmatmul.mubr.bf16.gmra.mxu0 %v989
        %v1083 = vpop.f32.mrf.mxu0
        %v1084 = vadd.f32 0.0, %v1083
        %v1085 = vpop.f32.mrf.mxu0
        %v1086 = vpop.f32.mrf.mxu0
        %v1087 = vpop.f32.mrf.mxu0
        %1088 = vdwg.mxu0
        %v1089 = vadd.f32 %v970, %v1084
        %s1090 = scalar_lea.vmem %s3, 80
        %v1091 = vld [vmem:[%s1090] sm:$0xf]
        %v1092 = vld [vmem:[%s1090 + $0x4] sm:$0xf]
        %v1093 = vld [vmem:[%s1090 + $0x8] sm:$0xf]
        %v1094 = vld [vmem:[%s1090 + $0xc] sm:$0xf]
        %v1099 = vunpack.c.l.b16 %v1091
        %v1100 = vunpack.c.l.b16 %v1092
        %v1101 = vunpack.c.l.b16 %v1093
        %v1102 = vunpack.c.l.b16 %v1094
        %v1103 = vpack.c.b16 %v1100, %v1099
        %v1104 = vpack.c.b16 %v1102, %v1101
        %v1108 = vsel %vm392, %v835, 0
        %1110 = vmatprep.subr.bf16.mxu0 0
        %1111 = vmatpush1.bf16.msra.mxu0 0
        %1112 = vmatprep.subr.bf16.mxu0 0
        %1113 = vmatpush1.bf16.msra.mxu0 0
        %1114 = vmatprep.subr.bf16.mxu0 0
        %1115 = vmatpush1.bf16.msra.mxu0 0
        %1116 = vmatprep.subr.bf16.mxu0 0
        %1117 = vmatpush1.bf16.msra.mxu0 0
        %1118 = vmatprep.subr.bf16.mxu0 0
        %1119 = vmatpush1.bf16.msra.mxu0 0
        %1120 = vmatprep.subr.bf16.mxu0 0
        %1121 = vmatpush1.bf16.msra.mxu0 0
        %1122 = vmatprep.subr.bf16.mxu0 0
        %1123 = vmatpush1.bf16.msra.mxu0 %v1104
        %1124 = vmatprep.subr.bf16.mxu0 0
        %1125 = vmatpush1.bf16.msra.mxu0 %v1103
        %1126 = vmatprep.subr.bf16.mxu0 0
        %1127 = vmatpush2.bf16.msra.mxu0 0
        %1128 = vmatprep.subr.bf16.mxu0 0
        %1129 = vmatpush2.bf16.msra.mxu0 0
        %1130 = vmatprep.subr.bf16.mxu0 0
        %1131 = vmatpush2.bf16.msra.mxu0 0
        %1132 = vmatprep.subr.bf16.mxu0 0
        %1133 = vmatpush2.bf16.msra.mxu0 0
        %1134 = vmatprep.subr.bf16.mxu0 0
        %1135 = vmatpush2.bf16.msra.mxu0 0
        %1136 = vmatprep.subr.bf16.mxu0 0
        %1137 = vmatpush2.bf16.msra.mxu0 0
        %1138 = vmatprep.subr.bf16.mxu0 0
        %1139 = vmatpush2.bf16.msra.mxu0 0
        %1140 = vmatprep.subr.bf16.mxu0 0
        %1141 = vmatpush2.bf16.msra.mxu0 0
        %1142 = vmatprep.mubr.bf16.mxu0 0
        %1143 = vmatmul.mubr.bf16.gmra.mxu0 %v1108
        %v1144 = vpop.f32.mrf.mxu0
        %v1145 = vadd.f32 0.0, %v1144
        %v1146 = vpop.f32.mrf.mxu0
        %v1147 = vpop.f32.mrf.mxu0
        %v1148 = vpop.f32.mrf.mxu0
        %1149 = vdwg.mxu0
        %v1150 = vadd.f32 %v1031, %v1145
        %s1151 = scalar_lea.vmem %s4, 80
        %v1152 = vld [vmem:[%s1151] sm:$0xf]
        %v1153 = vld [vmem:[%s1151 + $0x4] sm:$0xf]
        %v1154 = vld [vmem:[%s1151 + $0x8] sm:$0xf]
        %v1155 = vld [vmem:[%s1151 + $0xc] sm:$0xf]
        %v1160 = vunpack.c.l.b16 %v1152
        %v1161 = vunpack.c.l.b16 %v1153
        %v1162 = vunpack.c.l.b16 %v1154
        %v1163 = vunpack.c.l.b16 %v1155
        %v1164 = vpack.c.b16 %v1161, %v1160
        %v1165 = vpack.c.b16 %v1163, %v1162
        %1168 = vmatprep.subr.bf16.mxu0 0
        %1169 = vmatpush1.bf16.msra.mxu0 0
        %1170 = vmatprep.subr.bf16.mxu0 0
        %1171 = vmatpush1.bf16.msra.mxu0 0
        %1172 = vmatprep.subr.bf16.mxu0 0
        %1173 = vmatpush1.bf16.msra.mxu0 0
        %1174 = vmatprep.subr.bf16.mxu0 0
        %1175 = vmatpush1.bf16.msra.mxu0 0
        %1176 = vmatprep.subr.bf16.mxu0 0
        %1177 = vmatpush1.bf16.msra.mxu0 0
        %1178 = vmatprep.subr.bf16.mxu0 0
        %1179 = vmatpush1.bf16.msra.mxu0 0
        %1180 = vmatprep.subr.bf16.mxu0 0
        %1181 = vmatpush1.bf16.msra.mxu0 %v1165
        %1182 = vmatprep.subr.bf16.mxu0 0
        %1183 = vmatpush1.bf16.msra.mxu0 %v1164
        %1184 = vmatprep.subr.bf16.mxu0 0
        %1185 = vmatpush2.bf16.msra.mxu0 0
        %1186 = vmatprep.subr.bf16.mxu0 0
        %1187 = vmatpush2.bf16.msra.mxu0 0
        %1188 = vmatprep.subr.bf16.mxu0 0
        %1189 = vmatpush2.bf16.msra.mxu0 0
        %1190 = vmatprep.subr.bf16.mxu0 0
        %1191 = vmatpush2.bf16.msra.mxu0 0
        %1192 = vmatprep.subr.bf16.mxu0 0
        %1193 = vmatpush2.bf16.msra.mxu0 0
        %1194 = vmatprep.subr.bf16.mxu0 0
        %1195 = vmatpush2.bf16.msra.mxu0 0
        %1196 = vmatprep.subr.bf16.mxu0 0
        %1197 = vmatpush2.bf16.msra.mxu0 0
        %1198 = vmatprep.subr.bf16.mxu0 0
        %1199 = vmatpush2.bf16.msra.mxu0 0
        %1200 = vmatprep.mubr.bf16.mxu0 0
        %1201 = vmatmul.mubr.bf16.gmra.mxu0 %v1108
        %v1202 = vpop.f32.mrf.mxu0
        %v1203 = vadd.f32 0.0, %v1202
        %v1204 = vpop.f32.mrf.mxu0
        %v1205 = vpop.f32.mrf.mxu0
        %v1206 = vpop.f32.mrf.mxu0
        %1207 = vdwg.mxu0
        %v1208 = vadd.f32 %v1089, %v1203
        %v1209 = vxor.u32 %v1208, 2147483648
        %v1210 = vmul.f32 %v1209, 1.442695
        %v1211 = vpow.pop %v1210
        %v1212 = vadd.f32 %v1211, 1.0
        %v1213 = vrcp.pop %v1212
        %v1214 = vmul.f32 1.0, %v1213
        %v1215 = vmul.f32 %v1150, %v1214
        %v1216 = vadd.f32 %v1215, %v825
        %v1217 = vmul.f32 %v1216, 0.70710677
        %v1218 = vpack.c.bf16 %v1217, %v1217
        %v1219 = vld [vmem:[%s7] sm:$0xf]
        %v1220 = vld [vmem:[%s7 + $0x4] sm:$0xf]
        %v1221 = vld [vmem:[%s7 + $0x8] sm:$0xf]
        %v1222 = vld [vmem:[%s7 + $0xc] sm:$0xf]
        %v1223 = vld [vmem:[%s8] sm:$0x1]
        %v1225 = vlaneseq
        %v1226 = vshrl.u32 %v1225, 7
        %v1227 = vsub.s32 0, %v1226
        %v1228 = vrot.slane %v1223, %v1227
        %v1234 = vunpack.c.l.b16 %v1219
        %v1235 = vunpack.c.l.b16 %v1220
        %v1236 = vunpack.c.l.b16 %v1221
        %v1237 = vunpack.c.l.b16 %v1222
        %v1238 = vpack.c.b16 %v1235, %v1234
        %v1239 = vpack.c.b16 %v1237, %v1236
        %v1243 = vsel %vm392, %v1218, 0
        %1245 = vmatprep.subr.bf16.mxu0 0
        %1246 = vmatpush1.bf16.msra.mxu0 0
        %1247 = vmatprep.subr.bf16.mxu0 0
        %1248 = vmatpush1.bf16.msra.mxu0 0
        %1249 = vmatprep.subr.bf16.mxu0 0
        %1250 = vmatpush1.bf16.msra.mxu0 0
        %1251 = vmatprep.subr.bf16.mxu0 0
        %1252 = vmatpush1.bf16.msra.mxu0 0
        %1253 = vmatprep.subr.bf16.mxu0 0
        %1254 = vmatpush1.bf16.msra.mxu0 0
        %1255 = vmatprep.subr.bf16.mxu0 0
        %1256 = vmatpush1.bf16.msra.mxu0 0
        %1257 = vmatprep.subr.bf16.mxu0 0
        %1258 = vmatpush1.bf16.msra.mxu0 %v1239
        %1259 = vmatprep.subr.bf16.mxu0 0
        %1260 = vmatpush1.bf16.msra.mxu0 %v1238
        %1261 = vmatprep.subr.bf16.mxu0 0
        %1262 = vmatpush2.bf16.msra.mxu0 0
        %1263 = vmatprep.subr.bf16.mxu0 0
        %1264 = vmatpush2.bf16.msra.mxu0 0
        %1265 = vmatprep.subr.bf16.mxu0 0
        %1266 = vmatpush2.bf16.msra.mxu0 0
        %1267 = vmatprep.subr.bf16.mxu0 0
        %1268 = vmatpush2.bf16.msra.mxu0 0
        %1269 = vmatprep.subr.bf16.mxu0 0
        %1270 = vmatpush2.bf16.msra.mxu0 0
        %1271 = vmatprep.subr.bf16.mxu0 0
        %1272 = vmatpush2.bf16.msra.mxu0 0
        %1273 = vmatprep.subr.bf16.mxu0 0
        %1274 = vmatpush2.bf16.msra.mxu0 0
        %1275 = vmatprep.subr.bf16.mxu0 0
        %1276 = vmatpush2.bf16.msra.mxu0 0
        %1277 = vmatprep.mubr.bf16.mxu0 0
        %1278 = vmatmul.mubr.bf16.gmra.mxu0 %v1243
        %v1279 = vpop.f32.mrf.mxu0
        %v1280 = vadd.f32 %v1228, %v1279
        %v1281 = vpop.f32.mrf.mxu0
        %v1282 = vpop.f32.mrf.mxu0
        %v1283 = vpop.f32.mrf.mxu0
        %1284 = vdwg.mxu0
        %1285 = vst.msk [vmem:[%s354] sm:$0xff] %vm392, %v1280
        %v1286 = vadd.f32 %v1280, %v367
        %v1287 = vmul.f32 %v1286, 0.70710677
        %1288 = vst.msk [vmem:[%s361] sm:$0xff] %vm392, %v1287
        %s1289 = sand.u32 %s230, 1
        %s1290 = scalar_lea.sflag [#allocation3], %s1289
        %s1291 = sand.u32 %s230, 1
        %s1292 = smul.addr %s1291, 8
        %s1293 = scalar_lea.vmem [#allocation2], %s1292
        %s1294 = sand.u32 %s256, 1
        %s1295 = scalar_lea.sflag [#allocation5], %s1294
        %s1296 = sand.u32 %s256, 1
        %s1297 = smul.addr %s1296, 8
        %s1298 = scalar_lea.vmem [#allocation4], %s1297
        // Predicated region
        $region57: #{encoder_forward.1} parent=55 // pred_check
          %p1299 = pneg %p240
        $region58: #{encoder_forward.1} parent=55 // pred_check_branch
          %1301 = sbr.rel (%p1299) target = $region60
        $region59: #{encoder_forward.1} parent=55 // pred_region
          %s1303 = ssub.s32 128, 128
          %1304 = vsyncadd %s1290, %s1303
          %s1305 = smul.addr %s28, 128
          %s1306 = scalar_lea.hbm %s9, %s1305
          %s1308 = sshll.u32 %s1293, 4
          %s1309 = int_to_ptr.vmem [resolvable:$true] %s1308
          %1311 = dma.vmem_to_hbm [thread:$0]  %s1309, 128, %s1306, %s1290
        $region60: #{encoder_forward.1} parent=55 // pred_fallthru
          _
        // Predicated region
        $region61: #{encoder_forward.1} parent=55 // pred_check
          %p1312 = pneg %p266
        $region62: #{encoder_forward.1} parent=55 // pred_check_branch
          %1314 = sbr.rel (%p1312) target = $region64
        $region63: #{encoder_forward.1} parent=55 // pred_region
          %s1316 = ssub.s32 128, 128
          %1317 = vsyncadd %s1295, %s1316
          %s1318 = smul.addr %s28, 128
          %s1319 = scalar_lea.hbm %s10, %s1318
          %s1321 = sshll.u32 %s1298, 4
          %s1322 = int_to_ptr.vmem [resolvable:$true] %s1321
          %1324 = dma.vmem_to_hbm [thread:$0]  %s1322, 128, %s1319, %s1295
        $region64: #{encoder_forward.1} parent=55 // pred_fallthru
          _
      $region56: #{encoder_forward.1} parent=5 // pred_fallthru
        _
      %p1325 = scmp.le.s32.totalorder 2, %s23
      // Predicated region
      $region65: #{encoder_forward.1} parent=5 // pred_check
        %p1326 = pneg %p1325
      $region66: #{encoder_forward.1} parent=5 // pred_check_branch
        %1328 = sbr.rel (%p1326) target = $region68
      $region67: #{encoder_forward.1} parent=5 // pred_region
        %s1329 = ssub.s32 %s23, 2
        // Predicated region
        $region69: #{encoder_forward.1} parent=67 // pred_check
          %p1330 = pneg %p246
        $region70: #{encoder_forward.1} parent=67 // pred_check_branch
          %1332 = sbr.rel (%p1330) target = $region72
        $region71: #{encoder_forward.1} parent=67 // pred_region
          %s1333 = sand.u32 %s231, 1
          %s1334 = scalar_lea.sflag [#allocation3], %s1333
          %s1335 = sand.u32 %s231, 1
          %s1336 = smul.addr %s1335, 8
          %s1337 = scalar_lea.vmem [#allocation2], %s1336
          %1338 = dma.done %s1334, 128
        $region72: #{encoder_forward.1} parent=67 // pred_fallthru
          _
        // Predicated region
        $region73: #{encoder_forward.1} parent=67 // pred_check
          %p1339 = pneg %p272
        $region74: #{encoder_forward.1} parent=67 // pred_check_branch
          %1341 = sbr.rel (%p1339) target = $region76
        $region75: #{encoder_forward.1} parent=67 // pred_region
          %s1342 = sand.u32 %s257, 1
          %s1343 = scalar_lea.sflag [#allocation5], %s1342
          %s1344 = sand.u32 %s257, 1
          %s1345 = smul.addr %s1344, 8
          %s1346 = scalar_lea.vmem [#allocation4], %s1345
          %1347 = dma.done %s1343, 128
        $region76: #{encoder_forward.1} parent=67 // pred_fallthru
          _
      $region68: #{encoder_forward.1} parent=5 // pred_fallthru
        _
    $region6: #{encoder_forward.1} parent=1 // loop_footer
      %s27 = sadd.s32 1, %s23
    $region7: #{encoder_forward.1} parent=1 // loop_footer_branch
      %22 = sbr.rel target = $region3
    $region8: #{encoder_forward.1} parent=1 // loop_exit
      _
    %1348 = vsyncpa [#allocation3], 1
    %s1349 = scalar_lea.sflag [#allocation3], 1
    %1350 = vsyncpa %s1349, 1
    %1351 = vsyncpa [#allocation5], 1
    %s1352 = scalar_lea.sflag [#allocation5], 1
    %1353 = vsyncpa %s1352, 1

</llo_original>
